<compile_context>
chip_gen: v6e
topology: v6e:2x2x1
jax: 0.10.0
libtpu: 0.0.40
codegen_flags: <defaults>
</compile_context>

<pallas_src>
import functools

import jax
import jax.numpy as jnp
from jax import lax
from jax.experimental import pallas as pl
from jax.experimental.pallas import tpu as pltpu

OUT_PAD = 128  # lane-dense padded logits width (sliced back to 2 in the wrapper)


def classify_header_kernel(x_ref, w1_ref, b1_ref, w2_ref, b2_ref, out_ref, *, feat):
    """x_ref: (TB, 2F) packed [nl || pl]; feat = F (static)."""
    x = x_ref[...]                                     # (TB, 2F), full-lane load
    # Swap the two halves with a single XLU lane rotation: [pl || nl].
    x_sw = pltpu.roll(x, shift=feat, axis=1)
    lane = lax.broadcasted_iota(jnp.int32, x.shape, dimension=1)
    # First F lanes: nl*pl ; last F lanes: |pl-nl| == |nl-pl|.  All VPU work.
    pd = jnp.where(lane < feat, x * x_sw, jnp.abs(x - x_sw))     # (TB, 2F)

    # fuse = [nl*pl, |nl-pl|, nl, pl] -- identical order to the PyTorch module,
    # built with one 128-lane-aligned append.
    fuse = jnp.concatenate([pd, x], axis=1)            # (TB, 4F)

    # dense: one deep K=4F contraction on the MXU (exact f32 path).
    h = jnp.dot(fuse, w1_ref[...],
                preferred_element_type=jnp.float32,
                precision=jax.lax.Precision.HIGHEST)
    h += b1_ref[...]

    # sigmoid on the EUP; dropout(0.2) is identity in eval mode.
    s = jax.nn.sigmoid(h)

    # output_layer: lane-dense (TB, OUT_PAD) store; W2/b2 are zero-padded in the
    # wrapper so this is an unmasked full-lane vst.
    logits = jnp.dot(s, w2_ref[...],
                     preferred_element_type=jnp.float32,
                     precision=jax.lax.Precision.HIGHEST)
    logits += b2_ref[...]
    out_ref[...] = logits.astype(out_ref.dtype)


def _round_up(x, m):
    return ((x + m - 1) // m) * m


def classify_header(nl_hidden, pl_hidden, w1, b1, w2, b2, *, block_b=1024):
    """nl_hidden, pl_hidden: (B, F); w1: (4F, 2F); b1: (1, 2F); w2: (2F, 2); b2: (1, 2)."""
    B, F = nl_hidden.shape
    H2 = w1.shape[1]            # 2 * F
    out_dim = w2.shape[1]       # 2

    # Lane-dense packed activations [nl || pl] : (B, 2F).  (A caller that already
    # holds the concatenated hidden state can feed it straight through.)
    x = jnp.concatenate([nl_hidden, pl_hidden], axis=1)

    # Zero-pad the output projection to 128 lanes for unmasked stores.
    w2_p = jnp.zeros((H2, OUT_PAD), w2.dtype).at[:, :out_dim].set(w2)
    b2_p = jnp.zeros((1, OUT_PAD), b2.dtype).at[:, :out_dim].set(b2)

    # Batch tile: big tiles amortize the ~0.35 us per-grid-step overhead; when B
    # allows (>=16, multiple of 8) use >=2 grid steps so the "parallel" batch
    # axis shards across v7x's two TensorCores (no-op cost on v5e/v6e).
    if B > block_b:
        TB = block_b
    elif B >= 16 and B % 8 == 0:
        TB = max(8, _round_up(pl.cdiv(B, 2), 8))
    else:
        TB = B
    grid = (pl.cdiv(B, TB),)

    # Activations / output: indexed by the batch tile (double-buffered).
    # Weights / biases: constant index_map -> VMEM-resident across grid steps.
    act_spec = pl.BlockSpec((TB, 2 * F), lambda i: (i, 0))
    res_spec = lambda shape: pl.BlockSpec(shape, lambda i: (0, 0))

    cost = pl.CostEstimate(
        flops=2 * B * (4 * F * H2 + H2 * OUT_PAD),
        transcendentals=B * H2,
        bytes_accessed=4 * (B * 2 * F + B * OUT_PAD
                            + 4 * F * H2 + H2 + H2 * OUT_PAD + OUT_PAD),
    )

    out_padded = pl.pallas_call(
        functools.partial(classify_header_kernel, feat=F),
        out_shape=jax.ShapeDtypeStruct((B, OUT_PAD), jnp.float32),
        grid=grid,
        in_specs=[
            act_spec,                  # packed [nl || pl]
            res_spec(w1.shape),        # W1 (4F, 2F), resident
            res_spec(b1.shape),        # b1 (1, 2F), resident
            res_spec(w2_p.shape),      # W2 padded (2F, 128), resident
            res_spec(b2_p.shape),      # b2 padded (1, 128), resident
        ],
        out_specs=pl.BlockSpec((TB, OUT_PAD), lambda i: (i, 0)),
        compiler_params=pltpu.CompilerParams(
            dimension_semantics=("parallel",),
        ),
        cost_estimate=cost,
    )(x, w1, b1, w2_p, b2_p)

    return out_padded[:, :out_dim]


def reference(nl_hidden, pl_hidden, w1, b1, w2, b2):
    fuse = jnp.concatenate(
        [nl_hidden * pl_hidden, jnp.abs(nl_hidden - pl_hidden), nl_hidden, pl_hidden],
        axis=1,
    )
    h = jax.nn.sigmoid(
        jnp.dot(fuse, w1, precision=jax.lax.Precision.HIGHEST) + b1)
    return jnp.dot(h, w2, precision=jax.lax.Precision.HIGHEST) + b2


if __name__ == "__main__":
    hidden_size = 32
    rnn_type = "bi_gru"        # bi = 2 ; use "gru" for bi = 1
    bi = 2 if rnn_type == "bi_gru" else 1
    F = hidden_size * bi       # per-input feature width (64)
    B = 8                      # batch

    key = jax.random.PRNGKey(0)
    k_nl, k_pl, k_w1, k_b1, k_w2, k_b2 = jax.random.split(key, 6)

    nl_hidden = jax.random.normal(k_nl, (B, F), dtype=jnp.float32)
    pl_hidden = jax.random.normal(k_pl, (B, F), dtype=jnp.float32)

    # nn.Linear(4F, 2F) and nn.Linear(2F, 2), stored pre-transposed (in, out).
    w1 = jax.random.normal(k_w1, (4 * F, 2 * F), dtype=jnp.float32) * 0.05
    b1 = jax.random.normal(k_b1, (1, 2 * F), dtype=jnp.float32) * 0.05
    w2 = jax.random.normal(k_w2, (2 * F, 2), dtype=jnp.float32) * 0.05
    b2 = jax.random.normal(k_b2, (1, 2), dtype=jnp.float32) * 0.05

    logits = classify_header(nl_hidden, pl_hidden, w1, b1, w2, b2)
    logits = jax.block_until_ready(logits)

    ref = reference(nl_hidden, pl_hidden, w1, b1, w2, b2)
    assert logits.shape == (B, 2)
    assert jnp.allclose(logits, ref, atol=1e-5, rtol=1e-5)

    print("KERNEL_OK")
</pallas_src>

<mosaic_0001>
module attributes {stable_mosaic.version = 11 : i64} {
  func.func @classify_header_kernel(%arg0: i32, %arg1: memref<8x128xf32, #tpu.memory_space<vmem>>, %arg2: memref<256x128xf32, #tpu.memory_space<vmem>>, %arg3: memref<1x128xf32, #tpu.memory_space<vmem>>, %arg4: memref<128x128xf32, #tpu.memory_space<vmem>>, %arg5: memref<1x128xf32, #tpu.memory_space<vmem>>, %arg6: memref<8x128xf32, #tpu.memory_space<vmem>>) attributes {dimension_semantics = [#tpu.dimension_semantics<parallel>], iteration_bounds = array<i64: 1>, scalar_prefetch = 0 : i64, scratch_operands = 0 : i64, tpu.core_type = #tpu.core_type<tc>, window_params = [{transform_indices = @transform_0, window_bounds = array<i64: 8, 128>}, {pipeline_mode = #tpu.pipeline_mode<synchronous>, transform_indices = @transform_1, window_bounds = array<i64: 256, 128>}, {pipeline_mode = #tpu.pipeline_mode<synchronous>, transform_indices = @transform_2, window_bounds = array<i64: 1, 128>}, {pipeline_mode = #tpu.pipeline_mode<synchronous>, transform_indices = @transform_3, window_bounds = array<i64: 128, 128>}, {pipeline_mode = #tpu.pipeline_mode<synchronous>, transform_indices = @transform_4, window_bounds = array<i64: 1, 128>}, {transform_indices = @transform_5, window_bounds = array<i64: 8, 128>}]} {
    %c0 = arith.constant 0 : index
    %c0_0 = arith.constant 0 : index
    %0 = vector.load %arg1[%c0, %c0_0] : memref<8x128xf32, #tpu.memory_space<vmem>>, vector<8x128xf32>
    %c64_i32 = arith.constant 64 : i32
    %1 = tpu.dynamic_rotate %0 by %c64_i32 dim 1 : vector<8x128xf32>, i32 -> vector<8x128xf32>
    %2 = tpu.iota {dimensions = array<i32: 1>} : vector<8x128xi32>
    %c64_i32_1 = arith.constant 64 : i32
    %3 = vector.broadcast %c64_i32_1 : i32 to vector<8x128xi32>
    %4 = arith.cmpi slt, %2, %3 : vector<8x128xi32>
    %5 = arith.mulf %0, %1 : vector<8x128xf32>
    %6 = arith.subf %0, %1 : vector<8x128xf32>
    %7 = math.absf %6 : vector<8x128xf32>
    %8 = arith.select %4, %5, %7 : vector<8x128xi1>, vector<8x128xf32>
    %9 = tpu.concatenate %8, %0 in 1 : vector<8x128xf32>, vector<8x128xf32> -> vector<8x256xf32>
    %c0_2 = arith.constant 0 : index
    %c0_3 = arith.constant 0 : index
    %10 = vector.load %arg2[%c0_2, %c0_3] : memref<256x128xf32, #tpu.memory_space<vmem>>, vector<256x128xf32>
    %cst = arith.constant dense<0.000000e+00> : vector<8x128xf32>
    %11 = tpu.matmul %9, %10, %cst {dimension_numbers = #tpu.dot_dimension_numbers<[1], [0], [0], [1], [0, 0, 1, 1], [], []>, precision = #tpu.contract_precision<fp32>} : vector<8x256xf32>, vector<256x128xf32>, vector<8x128xf32> -> vector<8x128xf32>
    %c0_4 = arith.constant 0 : index
    %c0_5 = arith.constant 0 : index
    %12 = vector.load %arg3[%c0_4, %c0_5] : memref<1x128xf32, #tpu.memory_space<vmem>>, vector<1x128xf32>
    %13 = vector.broadcast %12 : vector<1x128xf32> to vector<8x128xf32>
    %14 = arith.addf %11, %13 : vector<8x128xf32>
    %15 = arith.negf %14 : vector<8x128xf32>
    %16 = math.exp %15 : vector<8x128xf32>
    %cst_6 = arith.constant 1.000000e+00 : f32
    %17 = vector.broadcast %cst_6 : f32 to vector<8x128xf32>
    %18 = arith.addf %17, %16 : vector<8x128xf32>
    %19 = arith.divf %17, %18 : vector<8x128xf32>
    %c0_7 = arith.constant 0 : index
    %c0_8 = arith.constant 0 : index
    %20 = vector.load %arg4[%c0_7, %c0_8] : memref<128x128xf32, #tpu.memory_space<vmem>>, vector<128x128xf32>
    %cst_9 = arith.constant dense<0.000000e+00> : vector<8x128xf32>
    %21 = tpu.matmul %19, %20, %cst_9 {dimension_numbers = #tpu.dot_dimension_numbers<[1], [0], [0], [1], [0, 0, 1, 1], [], []>, precision = #tpu.contract_precision<fp32>} : vector<8x128xf32>, vector<128x128xf32>, vector<8x128xf32> -> vector<8x128xf32>
    %c0_10 = arith.constant 0 : index
    %c0_11 = arith.constant 0 : index
    %22 = vector.load %arg5[%c0_10, %c0_11] : memref<1x128xf32, #tpu.memory_space<vmem>>, vector<1x128xf32>
    %23 = vector.broadcast %22 : vector<1x128xf32> to vector<8x128xf32>
    %24 = arith.addf %21, %23 : vector<8x128xf32>
    %c0_12 = arith.constant 0 : index
    %c0_13 = arith.constant 0 : index
    %25 = vector.load %arg6[%c0_12, %c0_13] : memref<8x128xf32, #tpu.memory_space<vmem>>, vector<8x128xf32>
    tpu.vector_store %arg6[%c0_12, %c0_13], %24 {strides = array<i32>} : memref<8x128xf32, #tpu.memory_space<vmem>>, vector<8x128xf32>,
    return
  }
  func.func @transform_0(%arg0: i32) -> (i32, i32) {
    %c0_i32 = arith.constant 0 : i32
    %c0_i32_0 = arith.constant 0 : i32
    return %arg0, %c0_i32 : i32, i32
  }
  func.func @transform_1(%arg0: i32) -> (i32, i32) {
    %c0_i32 = arith.constant 0 : i32
    %c0_i32_0 = arith.constant 0 : i32
    %c0_i32_1 = arith.constant 0 : i32
    return %c0_i32, %c0_i32_0 : i32, i32
  }
  func.func @transform_2(%arg0: i32) -> (i32, i32) {
    %c0_i32 = arith.constant 0 : i32
    %c0_i32_0 = arith.constant 0 : i32
    %c0_i32_1 = arith.constant 0 : i32
    return %c0_i32, %c0_i32_0 : i32, i32
  }
  func.func @transform_3(%arg0: i32) -> (i32, i32) {
    %c0_i32 = arith.constant 0 : i32
    %c0_i32_0 = arith.constant 0 : i32
    %c0_i32_1 = arith.constant 0 : i32
    return %c0_i32, %c0_i32_0 : i32, i32
  }
  func.func @transform_4(%arg0: i32) -> (i32, i32) {
    %c0_i32 = arith.constant 0 : i32
    %c0_i32_0 = arith.constant 0 : i32
    %c0_i32_1 = arith.constant 0 : i32
    return %c0_i32, %c0_i32_0 : i32, i32
  }
  func.func @transform_5(%arg0: i32) -> (i32, i32) {
    %c0_i32 = arith.constant 0 : i32
    %c0_i32_0 = arith.constant 0 : i32
    return %arg0, %c0_i32 : i32, i32
  }
}

</mosaic_0001>

<llo_original>
// kernel: tpu_custom_call.1
$region0: #{tpu_custom_call.1}
  #allocation0 [shape = 'u32[]', space=smem, size = 0x4, offset = 0x4, fixed_abs, tag = 'smem constant byte address 0x4 - core index']
  #allocation1 [shape = 'u32[144,128]{1,0:T(1,128)}', space=vmem, size = 0x12000, scoped, tag = 'internal scratch']
  %s0 = inlined_call_operand.hbm [shape: f32[8,128], index: 0, kind: input, shape index: {}]
  %s1 = inlined_call_operand.hbm [shape: f32[256,128], index: 1, kind: input, shape index: {}]
  %s2 = inlined_call_operand.vmem [shape: f32[1,128], index: 2, kind: input, shape index: {}]
  %s3 = inlined_call_operand.hbm [shape: f32[128,128], index: 3, kind: input, shape index: {}]
  %s4 = inlined_call_operand.vmem [shape: f32[1,128], index: 4, kind: input, shape index: {}]
  %s5 = inlined_call_operand.hbm [shape: f32[8,128], index: 5, kind: output, shape index: {}]
  %s6 = sld [smem:[#allocation0]]
  $region42: #{tpu_custom_call.1} parent=0
    _
  %s8 = ssub.s32 1, %s6
  %s9 = scalar_select 0, %s8, %s6
  $region1: #{tpu_custom_call.1} parent=0
    #allocation2 [shape = 'u8[4096]{0}', space=vmem, size = 0x1000, scoped, tag = 'input window, operand 0, single buffered']
    #allocation3 [shape = 's32[1]{0}', space=sflag, size = 0x4, scoped, tag = 'scoped memory for tpu_custom_call.1']
    #allocation4 [shape = 's32[1]{0}', space=sflag, size = 0x4, scoped, tag = 'scoped memory for tpu_custom_call.1']
    #allocation5 [shape = 'u8[131072]{0}', space=vmem, size = 0x20000, scoped, tag = 'input window, operand 1, single buffered']
    #allocation6 [shape = 's32[1]{0}', space=sflag, size = 0x4, scoped, tag = 'scoped memory for tpu_custom_call.1']
    #allocation7 [shape = 'u8[65536]{0}', space=vmem, size = 0x10000, scoped, tag = 'input window, operand 3, single buffered']
    #allocation8 [shape = 'u8[4096]{0}', space=vmem, size = 0x1000, scoped, tag = 'output window, operand 0, single buffered']
    %10 = vsyncpa [#allocation3], 0
    %11 = vsyncpa [#allocation6], 0
    %12 = vsyncpa [#allocation4], 0
    // Predicated region
    $region2: #{tpu_custom_call.1} parent=1 // pred_check
      _
    $region3: #{tpu_custom_call.1} parent=1 // pred_check_branch
      %14 = sbr.rel (0) target = $region5
    $region4: #{tpu_custom_call.1} parent=1 // pred_region
      %s16 = ssub.s32 128, 128
      %17 = vsyncadd [#allocation3], %s16
      %s19 = sshll.u32 [#allocation2], 4
      %s20 = int_to_ptr.vmem [resolvable:$true] %s19
      %22 = dma.hbm_to_vmem [thread:$0]  %s0, 128, %s20, [#allocation3]
    $region5: #{tpu_custom_call.1} parent=1 // pred_fallthru
      _
    // Predicated region
    $region6: #{tpu_custom_call.1} parent=1 // pred_check
      _
    $region7: #{tpu_custom_call.1} parent=1 // pred_check_branch
      %24 = sbr.rel (0) target = $region9
    $region8: #{tpu_custom_call.1} parent=1 // pred_region
      %s26 = ssub.s32 4096, 4096
      %27 = vsyncadd [#allocation6], %s26
      %s28 = sshll.u32 [#allocation5], 4
      %s29 = int_to_ptr.vmem [resolvable:$true] %s28
      %34 = dma.hbm_to_vmem [thread:$0]  %s1, 4096, %s29, [#allocation6], 128, 128, 8
    $region9: #{tpu_custom_call.1} parent=1 // pred_fallthru
      _
    // Predicated region
    $region10: #{tpu_custom_call.1} parent=1 // pred_check
      _
    $region11: #{tpu_custom_call.1} parent=1 // pred_check_branch
      %36 = sbr.rel (0) target = $region13
    $region12: #{tpu_custom_call.1} parent=1 // pred_region
      _
    $region13: #{tpu_custom_call.1} parent=1 // pred_fallthru
      _
    // Predicated region
    $region14: #{tpu_custom_call.1} parent=1 // pred_check
      _
    $region15: #{tpu_custom_call.1} parent=1 // pred_check_branch
      %38 = sbr.rel (0) target = $region17
    $region16: #{tpu_custom_call.1} parent=1 // pred_region
      %s40 = ssub.s32 2048, 2048
      %41 = vsyncadd [#allocation6], %s40
      %s42 = sshll.u32 [#allocation7], 4
      %s43 = int_to_ptr.vmem [resolvable:$true] %s42
      %48 = dma.hbm_to_vmem [thread:$0]  %s3, 2048, %s43, [#allocation6], 128, 128, 8
    $region17: #{tpu_custom_call.1} parent=1 // pred_fallthru
      _
    // Predicated region
    $region18: #{tpu_custom_call.1} parent=1 // pred_check
      _
    $region19: #{tpu_custom_call.1} parent=1 // pred_check_branch
      %50 = sbr.rel (0) target = $region21
    $region20: #{tpu_custom_call.1} parent=1 // pred_region
      _
    $region21: #{tpu_custom_call.1} parent=1 // pred_fallthru
      _
    // Predicated region
    $region22: #{tpu_custom_call.1} parent=1 // pred_check
      _
    $region23: #{tpu_custom_call.1} parent=1 // pred_check_branch
      %52 = sbr.rel (0) target = $region25
    $region24: #{tpu_custom_call.1} parent=1 // pred_region
      %53 = dma.done [#allocation3], 128
    $region25: #{tpu_custom_call.1} parent=1 // pred_fallthru
      _
    // Predicated region
    $region26: #{tpu_custom_call.1} parent=1 // pred_check
      _
    $region27: #{tpu_custom_call.1} parent=1 // pred_check_branch
      %55 = sbr.rel (0) target = $region29
    $region28: #{tpu_custom_call.1} parent=1 // pred_region
      %56 = dma.done [#allocation6], 4096
    $region29: #{tpu_custom_call.1} parent=1 // pred_fallthru
      _
    // Predicated region
    $region30: #{tpu_custom_call.1} parent=1 // pred_check
      _
    $region31: #{tpu_custom_call.1} parent=1 // pred_check_branch
      %58 = sbr.rel (0) target = $region33
    $region32: #{tpu_custom_call.1} parent=1 // pred_region
      %59 = dma.done [#allocation6], 2048
    $region33: #{tpu_custom_call.1} parent=1 // pred_fallthru
      _
    %v60 = vld [vmem:[#allocation2] sm:$0xff]
    %61 = vrot.lane.b32.xlu0 %v60, 64
    %v62 = vpop.permute.xlu0 %61
    %v63 = vlaneseq
    %v64 = vand.u32 %v63, 127
    %vm65 = vcmp.lt.s32.totalorder %v64, 64
    %v66 = vmul.f32 %v60, %v62
    %v67 = vsub.f32 %v60, %v62
    %v68 = vand.u32 2147483647, %v67
    %v69 = vsel %vm65, %v66, %v68
    %v70 = vld [vmem:[#allocation5] sm:$0xff]
    %v71 = vld [vmem:[#allocation5 + $0x8] sm:$0xff]
    %v72 = vld [vmem:[#allocation5 + $0x10] sm:$0xff]
    %v73 = vld [vmem:[#allocation5 + $0x18] sm:$0xff]
    %v74 = vld [vmem:[#allocation5 + $0x20] sm:$0xff]
    %v75 = vld [vmem:[#allocation5 + $0x28] sm:$0xff]
    %v76 = vld [vmem:[#allocation5 + $0x30] sm:$0xff]
    %v77 = vld [vmem:[#allocation5 + $0x38] sm:$0xff]
    %v78 = vld [vmem:[#allocation5 + $0x40] sm:$0xff]
    %v79 = vld [vmem:[#allocation5 + $0x48] sm:$0xff]
    %v80 = vld [vmem:[#allocation5 + $0x50] sm:$0xff]
    %v81 = vld [vmem:[#allocation5 + $0x58] sm:$0xff]
    %v82 = vld [vmem:[#allocation5 + $0x60] sm:$0xff]
    %v83 = vld [vmem:[#allocation5 + $0x68] sm:$0xff]
    %v84 = vld [vmem:[#allocation5 + $0x70] sm:$0xff]
    %v85 = vld [vmem:[#allocation5 + $0x78] sm:$0xff]
    %v86 = vld [vmem:[#allocation5 + $0x80] sm:$0xff]
    %v87 = vld [vmem:[#allocation5 + $0x88] sm:$0xff]
    %v88 = vld [vmem:[#allocation5 + $0x90] sm:$0xff]
    %v89 = vld [vmem:[#allocation5 + $0x98] sm:$0xff]
    %v90 = vld [vmem:[#allocation5 + $0xa0] sm:$0xff]
    %v91 = vld [vmem:[#allocation5 + $0xa8] sm:$0xff]
    %v92 = vld [vmem:[#allocation5 + $0xb0] sm:$0xff]
    %v93 = vld [vmem:[#allocation5 + $0xb8] sm:$0xff]
    %v94 = vld [vmem:[#allocation5 + $0xc0] sm:$0xff]
    %v95 = vld [vmem:[#allocation5 + $0xc8] sm:$0xff]
    %v96 = vld [vmem:[#allocation5 + $0xd0] sm:$0xff]
    %v97 = vld [vmem:[#allocation5 + $0xd8] sm:$0xff]
    %v98 = vld [vmem:[#allocation5 + $0xe0] sm:$0xff]
    %v99 = vld [vmem:[#allocation5 + $0xe8] sm:$0xff]
    %v100 = vld [vmem:[#allocation5 + $0xf0] sm:$0xff]
    %v101 = vld [vmem:[#allocation5 + $0xf8] sm:$0xff]
    %v102 = vld [vmem:[%s2] sm:$0x1]
    %v104 = vlaneseq
    %v105 = vshrl.u32 %v104, 7
    %v106 = vsub.s32 0, %v105
    %v107 = vrot.slane %v102, %v106
    %109 = vmatprep.subr.mxu0 0.0
    %v110 = vand.u32 %v85, 4294901760
    %111 = vmatpush1.msra.mxu0 %v110
    %112 = vmatprep.subr.mxu0 0.0
    %v113 = vand.u32 %v84, 4294901760
    %114 = vmatpush1.msra.mxu0 %v113
    %115 = vmatprep.subr.mxu0 0.0
    %v116 = vand.u32 %v83, 4294901760
    %117 = vmatpush1.msra.mxu0 %v116
    %118 = vmatprep.subr.mxu0 0.0
    %v119 = vand.u32 %v82, 4294901760
    %120 = vmatpush1.msra.mxu0 %v119
    %121 = vmatprep.subr.mxu0 0.0
    %v122 = vand.u32 %v81, 4294901760
    %123 = vmatpush1.msra.mxu0 %v122
    %124 = vmatprep.subr.mxu0 0.0
    %v125 = vand.u32 %v80, 4294901760
    %126 = vmatpush1.msra.mxu0 %v125
    %127 = vmatprep.subr.mxu0 0.0
    %v128 = vand.u32 %v79, 4294901760
    %129 = vmatpush1.msra.mxu0 %v128
    %130 = vmatprep.subr.mxu0 0.0
    %v131 = vand.u32 %v78, 4294901760
    %132 = vmatpush1.msra.mxu0 %v131
    %133 = vmatprep.subr.mxu0 0.0
    %v134 = vand.u32 %v77, 4294901760
    %135 = vmatpush1.msra.mxu0 %v134
    %136 = vmatprep.subr.mxu0 0.0
    %v137 = vand.u32 %v76, 4294901760
    %138 = vmatpush1.msra.mxu0 %v137
    %139 = vmatprep.subr.mxu0 0.0
    %v140 = vand.u32 %v75, 4294901760
    %141 = vmatpush1.msra.mxu0 %v140
    %142 = vmatprep.subr.mxu0 0.0
    %v143 = vand.u32 %v74, 4294901760
    %144 = vmatpush1.msra.mxu0 %v143
    %145 = vmatprep.subr.mxu0 0.0
    %v146 = vand.u32 %v73, 4294901760
    %147 = vmatpush1.msra.mxu0 %v146
    %148 = vmatprep.subr.mxu0 0.0
    %v149 = vand.u32 %v72, 4294901760
    %150 = vmatpush1.msra.mxu0 %v149
    %151 = vmatprep.subr.mxu0 0.0
    %v152 = vand.u32 %v71, 4294901760
    %153 = vmatpush1.msra.mxu0 %v152
    %154 = vmatprep.subr.mxu0 0.0
    %v155 = vand.u32 %v70, 4294901760
    %156 = vmatpush1.msra.mxu0 %v155
    %157 = vmatprep.subr.mxu0 0.0
    %v158 = vand.u32 %v101, 4294901760
    %159 = vmatpush2.msra.mxu0 %v158
    %160 = vmatprep.subr.mxu0 0.0
    %v161 = vand.u32 %v100, 4294901760
    %162 = vmatpush2.msra.mxu0 %v161
    %163 = vmatprep.subr.mxu0 0.0
    %v164 = vand.u32 %v99, 4294901760
    %165 = vmatpush2.msra.mxu0 %v164
    %166 = vmatprep.subr.mxu0 0.0
    %v167 = vand.u32 %v98, 4294901760
    %168 = vmatpush2.msra.mxu0 %v167
    %169 = vmatprep.subr.mxu0 0.0
    %v170 = vand.u32 %v97, 4294901760
    %171 = vmatpush2.msra.mxu0 %v170
    %172 = vmatprep.subr.mxu0 0.0
    %v173 = vand.u32 %v96, 4294901760
    %174 = vmatpush2.msra.mxu0 %v173
    %175 = vmatprep.subr.mxu0 0.0
    %v176 = vand.u32 %v95, 4294901760
    %177 = vmatpush2.msra.mxu0 %v176
    %178 = vmatprep.subr.mxu0 0.0
    %v179 = vand.u32 %v94, 4294901760
    %180 = vmatpush2.msra.mxu0 %v179
    %181 = vmatprep.subr.mxu0 0.0
    %v182 = vand.u32 %v93, 4294901760
    %183 = vmatpush2.msra.mxu0 %v182
    %184 = vmatprep.subr.mxu0 0.0
    %v185 = vand.u32 %v92, 4294901760
    %186 = vmatpush2.msra.mxu0 %v185
    %187 = vmatprep.subr.mxu0 0.0
    %v188 = vand.u32 %v91, 4294901760
    %189 = vmatpush2.msra.mxu0 %v188
    %190 = vmatprep.subr.mxu0 0.0
    %v191 = vand.u32 %v90, 4294901760
    %192 = vmatpush2.msra.mxu0 %v191
    %193 = vmatprep.subr.mxu0 0.0
    %v194 = vand.u32 %v89, 4294901760
    %195 = vmatpush2.msra.mxu0 %v194
    %196 = vmatprep.subr.mxu0 0.0
    %v197 = vand.u32 %v88, 4294901760
    %198 = vmatpush2.msra.mxu0 %v197
    %199 = vmatprep.subr.mxu0 0.0
    %v200 = vand.u32 %v87, 4294901760
    %201 = vmatpush2.msra.mxu0 %v200
    %202 = vmatprep.subr.mxu0 0.0
    %v203 = vand.u32 %v86, 4294901760
    %204 = vmatpush2.msra.mxu0 %v203
    %v205 = vand.u32 %v60, 4294901760
    %v206 = vsub.f32 %v60, %v205
    %v207 = vand.u32 %v206, 4294901760
    %v208 = vsub.f32 %v206, %v207
    %v209 = vand.u32 %v208, 4294901760
    %210 = vmatprep.mubr.f32.mxu0 %v209
    %v211 = vand.u32 %v69, 4294901760
    %v212 = vsub.f32 %v69, %v211
    %v213 = vand.u32 %v212, 4294901760
    %v214 = vsub.f32 %v212, %v213
    %v215 = vand.u32 %v214, 4294901760
    %216 = vmatmul.mubr.f32.gmra.mxu0 %v215
    %v217 = vpop.f32.mrf.mxu0
    %v218 = vadd.f32 %v107, %v217
    %v219 = vpop.f32.mrf.mxu0
    %220 = vdwg.mxu0
    %221 = vmatprep.subr.mxu0 0.0
    %v222 = vand.u32 %v85, 4294901760
    %v223 = vsub.f32 %v85, %v222
    %v224 = vand.u32 %v223, 4294901760
    %v225 = vsub.f32 %v223, %v224
    %v226 = vand.u32 %v225, 4294901760
    %227 = vmatpush1.msra.mxu0 %v226
    %228 = vmatprep.subr.mxu0 0.0
    %v229 = vand.u32 %v84, 4294901760
    %v230 = vsub.f32 %v84, %v229
    %v231 = vand.u32 %v230, 4294901760
    %v232 = vsub.f32 %v230, %v231
    %v233 = vand.u32 %v232, 4294901760
    %234 = vmatpush1.msra.mxu0 %v233
    %235 = vmatprep.subr.mxu0 0.0
    %v236 = vand.u32 %v83, 4294901760
    %v237 = vsub.f32 %v83, %v236
    %v238 = vand.u32 %v237, 4294901760
    %v239 = vsub.f32 %v237, %v238
    %v240 = vand.u32 %v239, 4294901760
    %241 = vmatpush1.msra.mxu0 %v240
    %242 = vmatprep.subr.mxu0 0.0
    %v243 = vand.u32 %v82, 4294901760
    %v244 = vsub.f32 %v82, %v243
    %v245 = vand.u32 %v244, 4294901760
    %v246 = vsub.f32 %v244, %v245
    %v247 = vand.u32 %v246, 4294901760
    %248 = vmatpush1.msra.mxu0 %v247
    %249 = vmatprep.subr.mxu0 0.0
    %v250 = vand.u32 %v81, 4294901760
    %v251 = vsub.f32 %v81, %v250
    %v252 = vand.u32 %v251, 4294901760
    %v253 = vsub.f32 %v251, %v252
    %v254 = vand.u32 %v253, 4294901760
    %255 = vmatpush1.msra.mxu0 %v254
    %256 = vmatprep.subr.mxu0 0.0
    %v257 = vand.u32 %v80, 4294901760
    %v258 = vsub.f32 %v80, %v257
    %v259 = vand.u32 %v258, 4294901760
    %v260 = vsub.f32 %v258, %v259
    %v261 = vand.u32 %v260, 4294901760
    %262 = vmatpush1.msra.mxu0 %v261
    %263 = vmatprep.subr.mxu0 0.0
    %v264 = vand.u32 %v79, 4294901760
    %v265 = vsub.f32 %v79, %v264
    %v266 = vand.u32 %v265, 4294901760
    %v267 = vsub.f32 %v265, %v266
    %v268 = vand.u32 %v267, 4294901760
    %269 = vmatpush1.msra.mxu0 %v268
    %270 = vmatprep.subr.mxu0 0.0
    %v271 = vand.u32 %v78, 4294901760
    %v272 = vsub.f32 %v78, %v271
    %v273 = vand.u32 %v272, 4294901760
    %v274 = vsub.f32 %v272, %v273
    %v275 = vand.u32 %v274, 4294901760
    %276 = vmatpush1.msra.mxu0 %v275
    %277 = vmatprep.subr.mxu0 0.0
    %v278 = vand.u32 %v77, 4294901760
    %v279 = vsub.f32 %v77, %v278
    %v280 = vand.u32 %v279, 4294901760
    %v281 = vsub.f32 %v279, %v280
    %v282 = vand.u32 %v281, 4294901760
    %283 = vmatpush1.msra.mxu0 %v282
    %284 = vmatprep.subr.mxu0 0.0
    %v285 = vand.u32 %v76, 4294901760
    %v286 = vsub.f32 %v76, %v285
    %v287 = vand.u32 %v286, 4294901760
    %v288 = vsub.f32 %v286, %v287
    %v289 = vand.u32 %v288, 4294901760
    %290 = vmatpush1.msra.mxu0 %v289
    %291 = vmatprep.subr.mxu0 0.0
    %v292 = vand.u32 %v75, 4294901760
    %v293 = vsub.f32 %v75, %v292
    %v294 = vand.u32 %v293, 4294901760
    %v295 = vsub.f32 %v293, %v294
    %v296 = vand.u32 %v295, 4294901760
    %297 = vmatpush1.msra.mxu0 %v296
    %298 = vmatprep.subr.mxu0 0.0
    %v299 = vand.u32 %v74, 4294901760
    %v300 = vsub.f32 %v74, %v299
    %v301 = vand.u32 %v300, 4294901760
    %v302 = vsub.f32 %v300, %v301
    %v303 = vand.u32 %v302, 4294901760
    %304 = vmatpush1.msra.mxu0 %v303
    %305 = vmatprep.subr.mxu0 0.0
    %v306 = vand.u32 %v73, 4294901760
    %v307 = vsub.f32 %v73, %v306
    %v308 = vand.u32 %v307, 4294901760
    %v309 = vsub.f32 %v307, %v308
    %v310 = vand.u32 %v309, 4294901760
    %311 = vmatpush1.msra.mxu0 %v310
    %312 = vmatprep.subr.mxu0 0.0
    %v313 = vand.u32 %v72, 4294901760
    %v314 = vsub.f32 %v72, %v313
    %v315 = vand.u32 %v314, 4294901760
    %v316 = vsub.f32 %v314, %v315
    %v317 = vand.u32 %v316, 4294901760
    %318 = vmatpush1.msra.mxu0 %v317
    %319 = vmatprep.subr.mxu0 0.0
    %v320 = vand.u32 %v71, 4294901760
    %v321 = vsub.f32 %v71, %v320
    %v322 = vand.u32 %v321, 4294901760
    %v323 = vsub.f32 %v321, %v322
    %v324 = vand.u32 %v323, 4294901760
    %325 = vmatpush1.msra.mxu0 %v324
    %326 = vmatprep.subr.mxu0 0.0
    %v327 = vand.u32 %v70, 4294901760
    %v328 = vsub.f32 %v70, %v327
    %v329 = vand.u32 %v328, 4294901760
    %v330 = vsub.f32 %v328, %v329
    %v331 = vand.u32 %v330, 4294901760
    %332 = vmatpush1.msra.mxu0 %v331
    %333 = vmatprep.subr.mxu0 0.0
    %v334 = vand.u32 %v101, 4294901760
    %v335 = vsub.f32 %v101, %v334
    %v336 = vand.u32 %v335, 4294901760
    %v337 = vsub.f32 %v335, %v336
    %v338 = vand.u32 %v337, 4294901760
    %339 = vmatpush2.msra.mxu0 %v338
    %340 = vmatprep.subr.mxu0 0.0
    %v341 = vand.u32 %v100, 4294901760
    %v342 = vsub.f32 %v100, %v341
    %v343 = vand.u32 %v342, 4294901760
    %v344 = vsub.f32 %v342, %v343
    %v345 = vand.u32 %v344, 4294901760
    %346 = vmatpush2.msra.mxu0 %v345
    %347 = vmatprep.subr.mxu0 0.0
    %v348 = vand.u32 %v99, 4294901760
    %v349 = vsub.f32 %v99, %v348
    %v350 = vand.u32 %v349, 4294901760
    %v351 = vsub.f32 %v349, %v350
    %v352 = vand.u32 %v351, 4294901760
    %353 = vmatpush2.msra.mxu0 %v352
    %354 = vmatprep.subr.mxu0 0.0
    %v355 = vand.u32 %v98, 4294901760
    %v356 = vsub.f32 %v98, %v355
    %v357 = vand.u32 %v356, 4294901760
    %v358 = vsub.f32 %v356, %v357
    %v359 = vand.u32 %v358, 4294901760
    %360 = vmatpush2.msra.mxu0 %v359
    %361 = vmatprep.subr.mxu0 0.0
    %v362 = vand.u32 %v97, 4294901760
    %v363 = vsub.f32 %v97, %v362
    %v364 = vand.u32 %v363, 4294901760
    %v365 = vsub.f32 %v363, %v364
    %v366 = vand.u32 %v365, 4294901760
    %367 = vmatpush2.msra.mxu0 %v366
    %368 = vmatprep.subr.mxu0 0.0
    %v369 = vand.u32 %v96, 4294901760
    %v370 = vsub.f32 %v96, %v369
    %v371 = vand.u32 %v370, 4294901760
    %v372 = vsub.f32 %v370, %v371
    %v373 = vand.u32 %v372, 4294901760
    %374 = vmatpush2.msra.mxu0 %v373
    %375 = vmatprep.subr.mxu0 0.0
    %v376 = vand.u32 %v95, 4294901760
    %v377 = vsub.f32 %v95, %v376
    %v378 = vand.u32 %v377, 4294901760
    %v379 = vsub.f32 %v377, %v378
    %v380 = vand.u32 %v379, 4294901760
    %381 = vmatpush2.msra.mxu0 %v380
    %382 = vmatprep.subr.mxu0 0.0
    %v383 = vand.u32 %v94, 4294901760
    %v384 = vsub.f32 %v94, %v383
    %v385 = vand.u32 %v384, 4294901760
    %v386 = vsub.f32 %v384, %v385
    %v387 = vand.u32 %v386, 4294901760
    %388 = vmatpush2.msra.mxu0 %v387
    %389 = vmatprep.subr.mxu0 0.0
    %v390 = vand.u32 %v93, 4294901760
    %v391 = vsub.f32 %v93, %v390
    %v392 = vand.u32 %v391, 4294901760
    %v393 = vsub.f32 %v391, %v392
    %v394 = vand.u32 %v393, 4294901760
    %395 = vmatpush2.msra.mxu0 %v394
    %396 = vmatprep.subr.mxu0 0.0
    %v397 = vand.u32 %v92, 4294901760
    %v398 = vsub.f32 %v92, %v397
    %v399 = vand.u32 %v398, 4294901760
    %v400 = vsub.f32 %v398, %v399
    %v401 = vand.u32 %v400, 4294901760
    %402 = vmatpush2.msra.mxu0 %v401
    %403 = vmatprep.subr.mxu0 0.0
    %v404 = vand.u32 %v91, 4294901760
    %v405 = vsub.f32 %v91, %v404
    %v406 = vand.u32 %v405, 4294901760
    %v407 = vsub.f32 %v405, %v406
    %v408 = vand.u32 %v407, 4294901760
    %409 = vmatpush2.msra.mxu0 %v408
    %410 = vmatprep.subr.mxu0 0.0
    %v411 = vand.u32 %v90, 4294901760
    %v412 = vsub.f32 %v90, %v411
    %v413 = vand.u32 %v412, 4294901760
    %v414 = vsub.f32 %v412, %v413
    %v415 = vand.u32 %v414, 4294901760
    %416 = vmatpush2.msra.mxu0 %v415
    %417 = vmatprep.subr.mxu0 0.0
    %v418 = vand.u32 %v89, 4294901760
    %v419 = vsub.f32 %v89, %v418
    %v420 = vand.u32 %v419, 4294901760
    %v421 = vsub.f32 %v419, %v420
    %v422 = vand.u32 %v421, 4294901760
    %423 = vmatpush2.msra.mxu0 %v422
    %424 = vmatprep.subr.mxu0 0.0
    %v425 = vand.u32 %v88, 4294901760
    %v426 = vsub.f32 %v88, %v425
    %v427 = vand.u32 %v426, 4294901760
    %v428 = vsub.f32 %v426, %v427
    %v429 = vand.u32 %v428, 4294901760
    %430 = vmatpush2.msra.mxu0 %v429
    %431 = vmatprep.subr.mxu0 0.0
    %v432 = vand.u32 %v87, 4294901760
    %v433 = vsub.f32 %v87, %v432
    %v434 = vand.u32 %v433, 4294901760
    %v435 = vsub.f32 %v433, %v434
    %v436 = vand.u32 %v435, 4294901760
    %437 = vmatpush2.msra.mxu0 %v436
    %438 = vmatprep.subr.mxu0 0.0
    %v439 = vand.u32 %v86, 4294901760
    %v440 = vsub.f32 %v86, %v439
    %v441 = vand.u32 %v440, 4294901760
    %v442 = vsub.f32 %v440, %v441
    %v443 = vand.u32 %v442, 4294901760
    %444 = vmatpush2.msra.mxu0 %v443
    %v445 = vand.u32 %v60, 4294901760
    %446 = vmatprep.mubr.f32.mxu0 %v445
    %v447 = vand.u32 %v69, 4294901760
    %448 = vmatmul.mubr.f32.gmra.mxu0 %v447
    %v449 = vpop.f32.mrf.mxu0
    %v450 = vadd.f32 %v218, %v449
    %v451 = vpop.f32.mrf.mxu0
    %452 = vdwg.mxu0
    %453 = vmatprep.subr.mxu0 0.0
    %v454 = vand.u32 %v85, 4294901760
    %v455 = vsub.f32 %v85, %v454
    %456 = vmatpush1.msra.mxu0 %v455
    %457 = vmatprep.subr.mxu0 0.0
    %v458 = vand.u32 %v84, 4294901760
    %v459 = vsub.f32 %v84, %v458
    %460 = vmatpush1.msra.mxu0 %v459
    %461 = vmatprep.subr.mxu0 0.0
    %v462 = vand.u32 %v83, 4294901760
    %v463 = vsub.f32 %v83, %v462
    %464 = vmatpush1.msra.mxu0 %v463
    %465 = vmatprep.subr.mxu0 0.0
    %v466 = vand.u32 %v82, 4294901760
    %v467 = vsub.f32 %v82, %v466
    %468 = vmatpush1.msra.mxu0 %v467
    %469 = vmatprep.subr.mxu0 0.0
    %v470 = vand.u32 %v81, 4294901760
    %v471 = vsub.f32 %v81, %v470
    %472 = vmatpush1.msra.mxu0 %v471
    %473 = vmatprep.subr.mxu0 0.0
    %v474 = vand.u32 %v80, 4294901760
    %v475 = vsub.f32 %v80, %v474
    %476 = vmatpush1.msra.mxu0 %v475
    %477 = vmatprep.subr.mxu0 0.0
    %v478 = vand.u32 %v79, 4294901760
    %v479 = vsub.f32 %v79, %v478
    %480 = vmatpush1.msra.mxu0 %v479
    %481 = vmatprep.subr.mxu0 0.0
    %v482 = vand.u32 %v78, 4294901760
    %v483 = vsub.f32 %v78, %v482
    %484 = vmatpush1.msra.mxu0 %v483
    %485 = vmatprep.subr.mxu0 0.0
    %v486 = vand.u32 %v77, 4294901760
    %v487 = vsub.f32 %v77, %v486
    %488 = vmatpush1.msra.mxu0 %v487
    %489 = vmatprep.subr.mxu0 0.0
    %v490 = vand.u32 %v76, 4294901760
    %v491 = vsub.f32 %v76, %v490
    %492 = vmatpush1.msra.mxu0 %v491
    %493 = vmatprep.subr.mxu0 0.0
    %v494 = vand.u32 %v75, 4294901760
    %v495 = vsub.f32 %v75, %v494
    %496 = vmatpush1.msra.mxu0 %v495
    %497 = vmatprep.subr.mxu0 0.0
    %v498 = vand.u32 %v74, 4294901760
    %v499 = vsub.f32 %v74, %v498
    %500 = vmatpush1.msra.mxu0 %v499
    %501 = vmatprep.subr.mxu0 0.0
    %v502 = vand.u32 %v73, 4294901760
    %v503 = vsub.f32 %v73, %v502
    %504 = vmatpush1.msra.mxu0 %v503
    %505 = vmatprep.subr.mxu0 0.0
    %v506 = vand.u32 %v72, 4294901760
    %v507 = vsub.f32 %v72, %v506
    %508 = vmatpush1.msra.mxu0 %v507
    %509 = vmatprep.subr.mxu0 0.0
    %v510 = vand.u32 %v71, 4294901760
    %v511 = vsub.f32 %v71, %v510
    %512 = vmatpush1.msra.mxu0 %v511
    %513 = vmatprep.subr.mxu0 0.0
    %v514 = vand.u32 %v70, 4294901760
    %v515 = vsub.f32 %v70, %v514
    %516 = vmatpush1.msra.mxu0 %v515
    %517 = vmatprep.subr.mxu0 0.0
    %v518 = vand.u32 %v101, 4294901760
    %v519 = vsub.f32 %v101, %v518
    %520 = vmatpush2.msra.mxu0 %v519
    %521 = vmatprep.subr.mxu0 0.0
    %v522 = vand.u32 %v100, 4294901760
    %v523 = vsub.f32 %v100, %v522
    %524 = vmatpush2.msra.mxu0 %v523
    %525 = vmatprep.subr.mxu0 0.0
    %v526 = vand.u32 %v99, 4294901760
    %v527 = vsub.f32 %v99, %v526
    %528 = vmatpush2.msra.mxu0 %v527
    %529 = vmatprep.subr.mxu0 0.0
    %v530 = vand.u32 %v98, 4294901760
    %v531 = vsub.f32 %v98, %v530
    %532 = vmatpush2.msra.mxu0 %v531
    %533 = vmatprep.subr.mxu0 0.0
    %v534 = vand.u32 %v97, 4294901760
    %v535 = vsub.f32 %v97, %v534
    %536 = vmatpush2.msra.mxu0 %v535
    %537 = vmatprep.subr.mxu0 0.0
    %v538 = vand.u32 %v96, 4294901760
    %v539 = vsub.f32 %v96, %v538
    %540 = vmatpush2.msra.mxu0 %v539
    %541 = vmatprep.subr.mxu0 0.0
    %v542 = vand.u32 %v95, 4294901760
    %v543 = vsub.f32 %v95, %v542
    %544 = vmatpush2.msra.mxu0 %v543
    %545 = vmatprep.subr.mxu0 0.0
    %v546 = vand.u32 %v94, 4294901760
    %v547 = vsub.f32 %v94, %v546
    %548 = vmatpush2.msra.mxu0 %v547
    %549 = vmatprep.subr.mxu0 0.0
    %v550 = vand.u32 %v93, 4294901760
    %v551 = vsub.f32 %v93, %v550
    %552 = vmatpush2.msra.mxu0 %v551
    %553 = vmatprep.subr.mxu0 0.0
    %v554 = vand.u32 %v92, 4294901760
    %v555 = vsub.f32 %v92, %v554
    %556 = vmatpush2.msra.mxu0 %v555
    %557 = vmatprep.subr.mxu0 0.0
    %v558 = vand.u32 %v91, 4294901760
    %v559 = vsub.f32 %v91, %v558
    %560 = vmatpush2.msra.mxu0 %v559
    %561 = vmatprep.subr.mxu0 0.0
    %v562 = vand.u32 %v90, 4294901760
    %v563 = vsub.f32 %v90, %v562
    %564 = vmatpush2.msra.mxu0 %v563
    %565 = vmatprep.subr.mxu0 0.0
    %v566 = vand.u32 %v89, 4294901760
    %v567 = vsub.f32 %v89, %v566
    %568 = vmatpush2.msra.mxu0 %v567
    %569 = vmatprep.subr.mxu0 0.0
    %v570 = vand.u32 %v88, 4294901760
    %v571 = vsub.f32 %v88, %v570
    %572 = vmatpush2.msra.mxu0 %v571
    %573 = vmatprep.subr.mxu0 0.0
    %v574 = vand.u32 %v87, 4294901760
    %v575 = vsub.f32 %v87, %v574
    %576 = vmatpush2.msra.mxu0 %v575
    %577 = vmatprep.subr.mxu0 0.0
    %v578 = vand.u32 %v86, 4294901760
    %v579 = vsub.f32 %v86, %v578
    %580 = vmatpush2.msra.mxu0 %v579
    %v581 = vand.u32 %v60, 4294901760
    %v582 = vsub.f32 %v60, %v581
    %583 = vmatprep.mubr.f32.mxu0 %v582
    %v584 = vand.u32 %v69, 4294901760
    %v585 = vsub.f32 %v69, %v584
    %586 = vmatmul.mubr.f32.gmra.mxu0 %v585
    %v587 = vpop.f32.mrf.mxu0
    %v588 = vadd.f32 %v450, %v587
    %v589 = vpop.f32.mrf.mxu0
    %590 = vdwg.mxu0
    %591 = vmatprep.subr.mxu0 0.0
    %v592 = vand.u32 %v85, 4294901760
    %593 = vmatpush1.msra.mxu0 %v592
    %594 = vmatprep.subr.mxu0 0.0
    %v595 = vand.u32 %v84, 4294901760
    %596 = vmatpush1.msra.mxu0 %v595
    %597 = vmatprep.subr.mxu0 0.0
    %v598 = vand.u32 %v83, 4294901760
    %599 = vmatpush1.msra.mxu0 %v598
    %600 = vmatprep.subr.mxu0 0.0
    %v601 = vand.u32 %v82, 4294901760
    %602 = vmatpush1.msra.mxu0 %v601
    %603 = vmatprep.subr.mxu0 0.0
    %v604 = vand.u32 %v81, 4294901760
    %605 = vmatpush1.msra.mxu0 %v604
    %606 = vmatprep.subr.mxu0 0.0
    %v607 = vand.u32 %v80, 4294901760
    %608 = vmatpush1.msra.mxu0 %v607
    %609 = vmatprep.subr.mxu0 0.0
    %v610 = vand.u32 %v79, 4294901760
    %611 = vmatpush1.msra.mxu0 %v610
    %612 = vmatprep.subr.mxu0 0.0
    %v613 = vand.u32 %v78, 4294901760
    %614 = vmatpush1.msra.mxu0 %v613
    %615 = vmatprep.subr.mxu0 0.0
    %v616 = vand.u32 %v77, 4294901760
    %617 = vmatpush1.msra.mxu0 %v616
    %618 = vmatprep.subr.mxu0 0.0
    %v619 = vand.u32 %v76, 4294901760
    %620 = vmatpush1.msra.mxu0 %v619
    %621 = vmatprep.subr.mxu0 0.0
    %v622 = vand.u32 %v75, 4294901760
    %623 = vmatpush1.msra.mxu0 %v622
    %624 = vmatprep.subr.mxu0 0.0
    %v625 = vand.u32 %v74, 4294901760
    %626 = vmatpush1.msra.mxu0 %v625
    %627 = vmatprep.subr.mxu0 0.0
    %v628 = vand.u32 %v73, 4294901760
    %629 = vmatpush1.msra.mxu0 %v628
    %630 = vmatprep.subr.mxu0 0.0
    %v631 = vand.u32 %v72, 4294901760
    %632 = vmatpush1.msra.mxu0 %v631
    %633 = vmatprep.subr.mxu0 0.0
    %v634 = vand.u32 %v71, 4294901760
    %635 = vmatpush1.msra.mxu0 %v634
    %636 = vmatprep.subr.mxu0 0.0
    %v637 = vand.u32 %v70, 4294901760
    %638 = vmatpush1.msra.mxu0 %v637
    %639 = vmatprep.subr.mxu0 0.0
    %v640 = vand.u32 %v101, 4294901760
    %641 = vmatpush2.msra.mxu0 %v640
    %642 = vmatprep.subr.mxu0 0.0
    %v643 = vand.u32 %v100, 4294901760
    %644 = vmatpush2.msra.mxu0 %v643
    %645 = vmatprep.subr.mxu0 0.0
    %v646 = vand.u32 %v99, 4294901760
    %647 = vmatpush2.msra.mxu0 %v646
    %648 = vmatprep.subr.mxu0 0.0
    %v649 = vand.u32 %v98, 4294901760
    %650 = vmatpush2.msra.mxu0 %v649
    %651 = vmatprep.subr.mxu0 0.0
    %v652 = vand.u32 %v97, 4294901760
    %653 = vmatpush2.msra.mxu0 %v652
    %654 = vmatprep.subr.mxu0 0.0
    %v655 = vand.u32 %v96, 4294901760
    %656 = vmatpush2.msra.mxu0 %v655
    %657 = vmatprep.subr.mxu0 0.0
    %v658 = vand.u32 %v95, 4294901760
    %659 = vmatpush2.msra.mxu0 %v658
    %660 = vmatprep.subr.mxu0 0.0
    %v661 = vand.u32 %v94, 4294901760
    %662 = vmatpush2.msra.mxu0 %v661
    %663 = vmatprep.subr.mxu0 0.0
    %v664 = vand.u32 %v93, 4294901760
    %665 = vmatpush2.msra.mxu0 %v664
    %666 = vmatprep.subr.mxu0 0.0
    %v667 = vand.u32 %v92, 4294901760
    %668 = vmatpush2.msra.mxu0 %v667
    %669 = vmatprep.subr.mxu0 0.0
    %v670 = vand.u32 %v91, 4294901760
    %671 = vmatpush2.msra.mxu0 %v670
    %672 = vmatprep.subr.mxu0 0.0
    %v673 = vand.u32 %v90, 4294901760
    %674 = vmatpush2.msra.mxu0 %v673
    %675 = vmatprep.subr.mxu0 0.0
    %v676 = vand.u32 %v89, 4294901760
    %677 = vmatpush2.msra.mxu0 %v676
    %678 = vmatprep.subr.mxu0 0.0
    %v679 = vand.u32 %v88, 4294901760
    %680 = vmatpush2.msra.mxu0 %v679
    %681 = vmatprep.subr.mxu0 0.0
    %v682 = vand.u32 %v87, 4294901760
    %683 = vmatpush2.msra.mxu0 %v682
    %684 = vmatprep.subr.mxu0 0.0
    %v685 = vand.u32 %v86, 4294901760
    %686 = vmatpush2.msra.mxu0 %v685
    %v687 = vand.u32 %v60, 4294901760
    %v688 = vsub.f32 %v60, %v687
    %v689 = vand.u32 %v688, 4294901760
    %690 = vmatprep.mubr.f32.mxu0 %v689
    %v691 = vand.u32 %v69, 4294901760
    %v692 = vsub.f32 %v69, %v691
    %v693 = vand.u32 %v692, 4294901760
    %694 = vmatmul.mubr.f32.gmra.mxu0 %v693
    %v695 = vpop.f32.mrf.mxu0
    %v696 = vadd.f32 %v588, %v695
    %v697 = vpop.f32.mrf.mxu0
    %698 = vdwg.mxu0
    %699 = vmatprep.subr.mxu0 0.0
    %v700 = vand.u32 %v85, 4294901760
    %v701 = vsub.f32 %v85, %v700
    %v702 = vand.u32 %v701, 4294901760
    %703 = vmatpush1.msra.mxu0 %v702
    %704 = vmatprep.subr.mxu0 0.0
    %v705 = vand.u32 %v84, 4294901760
    %v706 = vsub.f32 %v84, %v705
    %v707 = vand.u32 %v706, 4294901760
    %708 = vmatpush1.msra.mxu0 %v707
    %709 = vmatprep.subr.mxu0 0.0
    %v710 = vand.u32 %v83, 4294901760
    %v711 = vsub.f32 %v83, %v710
    %v712 = vand.u32 %v711, 4294901760
    %713 = vmatpush1.msra.mxu0 %v712
    %714 = vmatprep.subr.mxu0 0.0
    %v715 = vand.u32 %v82, 4294901760
    %v716 = vsub.f32 %v82, %v715
    %v717 = vand.u32 %v716, 4294901760
    %718 = vmatpush1.msra.mxu0 %v717
    %719 = vmatprep.subr.mxu0 0.0
    %v720 = vand.u32 %v81, 4294901760
    %v721 = vsub.f32 %v81, %v720
    %v722 = vand.u32 %v721, 4294901760
    %723 = vmatpush1.msra.mxu0 %v722
    %724 = vmatprep.subr.mxu0 0.0
    %v725 = vand.u32 %v80, 4294901760
    %v726 = vsub.f32 %v80, %v725
    %v727 = vand.u32 %v726, 4294901760
    %728 = vmatpush1.msra.mxu0 %v727
    %729 = vmatprep.subr.mxu0 0.0
    %v730 = vand.u32 %v79, 4294901760
    %v731 = vsub.f32 %v79, %v730
    %v732 = vand.u32 %v731, 4294901760
    %733 = vmatpush1.msra.mxu0 %v732
    %734 = vmatprep.subr.mxu0 0.0
    %v735 = vand.u32 %v78, 4294901760
    %v736 = vsub.f32 %v78, %v735
    %v737 = vand.u32 %v736, 4294901760
    %738 = vmatpush1.msra.mxu0 %v737
    %739 = vmatprep.subr.mxu0 0.0
    %v740 = vand.u32 %v77, 4294901760
    %v741 = vsub.f32 %v77, %v740
    %v742 = vand.u32 %v741, 4294901760
    %743 = vmatpush1.msra.mxu0 %v742
    %744 = vmatprep.subr.mxu0 0.0
    %v745 = vand.u32 %v76, 4294901760
    %v746 = vsub.f32 %v76, %v745
    %v747 = vand.u32 %v746, 4294901760
    %748 = vmatpush1.msra.mxu0 %v747
    %749 = vmatprep.subr.mxu0 0.0
    %v750 = vand.u32 %v75, 4294901760
    %v751 = vsub.f32 %v75, %v750
    %v752 = vand.u32 %v751, 4294901760
    %753 = vmatpush1.msra.mxu0 %v752
    %754 = vmatprep.subr.mxu0 0.0
    %v755 = vand.u32 %v74, 4294901760
    %v756 = vsub.f32 %v74, %v755
    %v757 = vand.u32 %v756, 4294901760
    %758 = vmatpush1.msra.mxu0 %v757
    %759 = vmatprep.subr.mxu0 0.0
    %v760 = vand.u32 %v73, 4294901760
    %v761 = vsub.f32 %v73, %v760
    %v762 = vand.u32 %v761, 4294901760
    %763 = vmatpush1.msra.mxu0 %v762
    %764 = vmatprep.subr.mxu0 0.0
    %v765 = vand.u32 %v72, 4294901760
    %v766 = vsub.f32 %v72, %v765
    %v767 = vand.u32 %v766, 4294901760
    %768 = vmatpush1.msra.mxu0 %v767
    %769 = vmatprep.subr.mxu0 0.0
    %v770 = vand.u32 %v71, 4294901760
    %v771 = vsub.f32 %v71, %v770
    %v772 = vand.u32 %v771, 4294901760
    %773 = vmatpush1.msra.mxu0 %v772
    %774 = vmatprep.subr.mxu0 0.0
    %v775 = vand.u32 %v70, 4294901760
    %v776 = vsub.f32 %v70, %v775
    %v777 = vand.u32 %v776, 4294901760
    %778 = vmatpush1.msra.mxu0 %v777
    %779 = vmatprep.subr.mxu0 0.0
    %v780 = vand.u32 %v101, 4294901760
    %v781 = vsub.f32 %v101, %v780
    %v782 = vand.u32 %v781, 4294901760
    %783 = vmatpush2.msra.mxu0 %v782
    %784 = vmatprep.subr.mxu0 0.0
    %v785 = vand.u32 %v100, 4294901760
    %v786 = vsub.f32 %v100, %v785
    %v787 = vand.u32 %v786, 4294901760
    %788 = vmatpush2.msra.mxu0 %v787
    %789 = vmatprep.subr.mxu0 0.0
    %v790 = vand.u32 %v99, 4294901760
    %v791 = vsub.f32 %v99, %v790
    %v792 = vand.u32 %v791, 4294901760
    %793 = vmatpush2.msra.mxu0 %v792
    %794 = vmatprep.subr.mxu0 0.0
    %v795 = vand.u32 %v98, 4294901760
    %v796 = vsub.f32 %v98, %v795
    %v797 = vand.u32 %v796, 4294901760
    %798 = vmatpush2.msra.mxu0 %v797
    %799 = vmatprep.subr.mxu0 0.0
    %v800 = vand.u32 %v97, 4294901760
    %v801 = vsub.f32 %v97, %v800
    %v802 = vand.u32 %v801, 4294901760
    %803 = vmatpush2.msra.mxu0 %v802
    %804 = vmatprep.subr.mxu0 0.0
    %v805 = vand.u32 %v96, 4294901760
    %v806 = vsub.f32 %v96, %v805
    %v807 = vand.u32 %v806, 4294901760
    %808 = vmatpush2.msra.mxu0 %v807
    %809 = vmatprep.subr.mxu0 0.0
    %v810 = vand.u32 %v95, 4294901760
    %v811 = vsub.f32 %v95, %v810
    %v812 = vand.u32 %v811, 4294901760
    %813 = vmatpush2.msra.mxu0 %v812
    %814 = vmatprep.subr.mxu0 0.0
    %v815 = vand.u32 %v94, 4294901760
    %v816 = vsub.f32 %v94, %v815
    %v817 = vand.u32 %v816, 4294901760
    %818 = vmatpush2.msra.mxu0 %v817
    %819 = vmatprep.subr.mxu0 0.0
    %v820 = vand.u32 %v93, 4294901760
    %v821 = vsub.f32 %v93, %v820
    %v822 = vand.u32 %v821, 4294901760
    %823 = vmatpush2.msra.mxu0 %v822
    %824 = vmatprep.subr.mxu0 0.0
    %v825 = vand.u32 %v92, 4294901760
    %v826 = vsub.f32 %v92, %v825
    %v827 = vand.u32 %v826, 4294901760
    %828 = vmatpush2.msra.mxu0 %v827
    %829 = vmatprep.subr.mxu0 0.0
    %v830 = vand.u32 %v91, 4294901760
    %v831 = vsub.f32 %v91, %v830
    %v832 = vand.u32 %v831, 4294901760
    %833 = vmatpush2.msra.mxu0 %v832
    %834 = vmatprep.subr.mxu0 0.0
    %v835 = vand.u32 %v90, 4294901760
    %v836 = vsub.f32 %v90, %v835
    %v837 = vand.u32 %v836, 4294901760
    %838 = vmatpush2.msra.mxu0 %v837
    %839 = vmatprep.subr.mxu0 0.0
    %v840 = vand.u32 %v89, 4294901760
    %v841 = vsub.f32 %v89, %v840
    %v842 = vand.u32 %v841, 4294901760
    %843 = vmatpush2.msra.mxu0 %v842
    %844 = vmatprep.subr.mxu0 0.0
    %v845 = vand.u32 %v88, 4294901760
    %v846 = vsub.f32 %v88, %v845
    %v847 = vand.u32 %v846, 4294901760
    %848 = vmatpush2.msra.mxu0 %v847
    %849 = vmatprep.subr.mxu0 0.0
    %v850 = vand.u32 %v87, 4294901760
    %v851 = vsub.f32 %v87, %v850
    %v852 = vand.u32 %v851, 4294901760
    %853 = vmatpush2.msra.mxu0 %v852
    %854 = vmatprep.subr.mxu0 0.0
    %v855 = vand.u32 %v86, 4294901760
    %v856 = vsub.f32 %v86, %v855
    %v857 = vand.u32 %v856, 4294901760
    %858 = vmatpush2.msra.mxu0 %v857
    %v859 = vand.u32 %v60, 4294901760
    %860 = vmatprep.mubr.f32.mxu0 %v859
    %v861 = vand.u32 %v69, 4294901760
    %862 = vmatmul.mubr.f32.gmra.mxu0 %v861
    %v863 = vpop.f32.mrf.mxu0
    %v864 = vadd.f32 %v696, %v863
    %v865 = vpop.f32.mrf.mxu0
    %866 = vdwg.mxu0
    %867 = vmatprep.subr.mxu0 0.0
    %v868 = vand.u32 %v85, 4294901760
    %869 = vmatpush1.msra.mxu0 %v868
    %870 = vmatprep.subr.mxu0 0.0
    %v871 = vand.u32 %v84, 4294901760
    %872 = vmatpush1.msra.mxu0 %v871
    %873 = vmatprep.subr.mxu0 0.0
    %v874 = vand.u32 %v83, 4294901760
    %875 = vmatpush1.msra.mxu0 %v874
    %876 = vmatprep.subr.mxu0 0.0
    %v877 = vand.u32 %v82, 4294901760
    %878 = vmatpush1.msra.mxu0 %v877
    %879 = vmatprep.subr.mxu0 0.0
    %v880 = vand.u32 %v81, 4294901760
    %881 = vmatpush1.msra.mxu0 %v880
    %882 = vmatprep.subr.mxu0 0.0
    %v883 = vand.u32 %v80, 4294901760
    %884 = vmatpush1.msra.mxu0 %v883
    %885 = vmatprep.subr.mxu0 0.0
    %v886 = vand.u32 %v79, 4294901760
    %887 = vmatpush1.msra.mxu0 %v886
    %888 = vmatprep.subr.mxu0 0.0
    %v889 = vand.u32 %v78, 4294901760
    %890 = vmatpush1.msra.mxu0 %v889
    %891 = vmatprep.subr.mxu0 0.0
    %v892 = vand.u32 %v77, 4294901760
    %893 = vmatpush1.msra.mxu0 %v892
    %894 = vmatprep.subr.mxu0 0.0
    %v895 = vand.u32 %v76, 4294901760
    %896 = vmatpush1.msra.mxu0 %v895
    %897 = vmatprep.subr.mxu0 0.0
    %v898 = vand.u32 %v75, 4294901760
    %899 = vmatpush1.msra.mxu0 %v898
    %900 = vmatprep.subr.mxu0 0.0
    %v901 = vand.u32 %v74, 4294901760
    %902 = vmatpush1.msra.mxu0 %v901
    %903 = vmatprep.subr.mxu0 0.0
    %v904 = vand.u32 %v73, 4294901760
    %905 = vmatpush1.msra.mxu0 %v904
    %906 = vmatprep.subr.mxu0 0.0
    %v907 = vand.u32 %v72, 4294901760
    %908 = vmatpush1.msra.mxu0 %v907
    %909 = vmatprep.subr.mxu0 0.0
    %v910 = vand.u32 %v71, 4294901760
    %911 = vmatpush1.msra.mxu0 %v910
    %912 = vmatprep.subr.mxu0 0.0
    %v913 = vand.u32 %v70, 4294901760
    %914 = vmatpush1.msra.mxu0 %v913
    %915 = vmatprep.subr.mxu0 0.0
    %v916 = vand.u32 %v101, 4294901760
    %917 = vmatpush2.msra.mxu0 %v916
    %918 = vmatprep.subr.mxu0 0.0
    %v919 = vand.u32 %v100, 4294901760
    %920 = vmatpush2.msra.mxu0 %v919
    %921 = vmatprep.subr.mxu0 0.0
    %v922 = vand.u32 %v99, 4294901760
    %923 = vmatpush2.msra.mxu0 %v922
    %924 = vmatprep.subr.mxu0 0.0
    %v925 = vand.u32 %v98, 4294901760
    %926 = vmatpush2.msra.mxu0 %v925
    %927 = vmatprep.subr.mxu0 0.0
    %v928 = vand.u32 %v97, 4294901760
    %929 = vmatpush2.msra.mxu0 %v928
    %930 = vmatprep.subr.mxu0 0.0
    %v931 = vand.u32 %v96, 4294901760
    %932 = vmatpush2.msra.mxu0 %v931
    %933 = vmatprep.subr.mxu0 0.0
    %v934 = vand.u32 %v95, 4294901760
    %935 = vmatpush2.msra.mxu0 %v934
    %936 = vmatprep.subr.mxu0 0.0
    %v937 = vand.u32 %v94, 4294901760
    %938 = vmatpush2.msra.mxu0 %v937
    %939 = vmatprep.subr.mxu0 0.0
    %v940 = vand.u32 %v93, 4294901760
    %941 = vmatpush2.msra.mxu0 %v940
    %942 = vmatprep.subr.mxu0 0.0
    %v943 = vand.u32 %v92, 4294901760
    %944 = vmatpush2.msra.mxu0 %v943
    %945 = vmatprep.subr.mxu0 0.0
    %v946 = vand.u32 %v91, 4294901760
    %947 = vmatpush2.msra.mxu0 %v946
    %948 = vmatprep.subr.mxu0 0.0
    %v949 = vand.u32 %v90, 4294901760
    %950 = vmatpush2.msra.mxu0 %v949
    %951 = vmatprep.subr.mxu0 0.0
    %v952 = vand.u32 %v89, 4294901760
    %953 = vmatpush2.msra.mxu0 %v952
    %954 = vmatprep.subr.mxu0 0.0
    %v955 = vand.u32 %v88, 4294901760
    %956 = vmatpush2.msra.mxu0 %v955
    %957 = vmatprep.subr.mxu0 0.0
    %v958 = vand.u32 %v87, 4294901760
    %959 = vmatpush2.msra.mxu0 %v958
    %960 = vmatprep.subr.mxu0 0.0
    %v961 = vand.u32 %v86, 4294901760
    %962 = vmatpush2.msra.mxu0 %v961
    %v963 = vand.u32 %v60, 4294901760
    %964 = vmatprep.mubr.f32.mxu0 %v963
    %v965 = vand.u32 %v69, 4294901760
    %966 = vmatmul.mubr.f32.gmra.mxu0 %v965
    %v967 = vpop.f32.mrf.mxu0
    %v968 = vadd.f32 %v864, %v967
    %v969 = vpop.f32.mrf.mxu0
    %970 = vdwg.mxu0
    %v971 = vxor.u32 %v968, 2147483648
    %v972 = vmul.f32 %v971, 1.442695
    %v973 = vpow.pop %v972
    %v974 = vadd.f32 %v973, 1.0
    %v975 = vrcp.pop %v974
    %v976 = vmul.f32 1.0, %v975
    %v977 = vld [vmem:[#allocation7] sm:$0xff]
    %v978 = vld [vmem:[#allocation7 + $0x8] sm:$0xff]
    %v979 = vld [vmem:[#allocation7 + $0x10] sm:$0xff]
    %v980 = vld [vmem:[#allocation7 + $0x18] sm:$0xff]
    %v981 = vld [vmem:[#allocation7 + $0x20] sm:$0xff]
    %v982 = vld [vmem:[#allocation7 + $0x28] sm:$0xff]
    %v983 = vld [vmem:[#allocation7 + $0x30] sm:$0xff]
    %v984 = vld [vmem:[#allocation7 + $0x38] sm:$0xff]
    %v985 = vld [vmem:[#allocation7 + $0x40] sm:$0xff]
    %v986 = vld [vmem:[#allocation7 + $0x48] sm:$0xff]
    %v987 = vld [vmem:[#allocation7 + $0x50] sm:$0xff]
    %v988 = vld [vmem:[#allocation7 + $0x58] sm:$0xff]
    %v989 = vld [vmem:[#allocation7 + $0x60] sm:$0xff]
    %v990 = vld [vmem:[#allocation7 + $0x68] sm:$0xff]
    %v991 = vld [vmem:[#allocation7 + $0x70] sm:$0xff]
    %v992 = vld [vmem:[#allocation7 + $0x78] sm:$0xff]
    %v993 = vld [vmem:[%s4] sm:$0x1]
    %v995 = vlaneseq
    %v996 = vshrl.u32 %v995, 7
    %v997 = vsub.s32 0, %v996
    %v998 = vrot.slane %v993, %v997
    %1000 = vmatprep.subr.mxu0 0.0
    %v1001 = vand.u32 %v992, 4294901760
    %1002 = vmatpush1.msra.mxu0 %v1001
    %1003 = vmatprep.subr.mxu0 0.0
    %v1004 = vand.u32 %v991, 4294901760
    %1005 = vmatpush1.msra.mxu0 %v1004
    %1006 = vmatprep.subr.mxu0 0.0
    %v1007 = vand.u32 %v990, 4294901760
    %1008 = vmatpush1.msra.mxu0 %v1007
    %1009 = vmatprep.subr.mxu0 0.0
    %v1010 = vand.u32 %v989, 4294901760
    %1011 = vmatpush1.msra.mxu0 %v1010
    %1012 = vmatprep.subr.mxu0 0.0
    %v1013 = vand.u32 %v988, 4294901760
    %1014 = vmatpush1.msra.mxu0 %v1013
    %1015 = vmatprep.subr.mxu0 0.0
    %v1016 = vand.u32 %v987, 4294901760
    %1017 = vmatpush1.msra.mxu0 %v1016
    %1018 = vmatprep.subr.mxu0 0.0
    %v1019 = vand.u32 %v986, 4294901760
    %1020 = vmatpush1.msra.mxu0 %v1019
    %1021 = vmatprep.subr.mxu0 0.0
    %v1022 = vand.u32 %v985, 4294901760
    %1023 = vmatpush1.msra.mxu0 %v1022
    %1024 = vmatprep.subr.mxu0 0.0
    %v1025 = vand.u32 %v984, 4294901760
    %1026 = vmatpush1.msra.mxu0 %v1025
    %1027 = vmatprep.subr.mxu0 0.0
    %v1028 = vand.u32 %v983, 4294901760
    %1029 = vmatpush1.msra.mxu0 %v1028
    %1030 = vmatprep.subr.mxu0 0.0
    %v1031 = vand.u32 %v982, 4294901760
    %1032 = vmatpush1.msra.mxu0 %v1031
    %1033 = vmatprep.subr.mxu0 0.0
    %v1034 = vand.u32 %v981, 4294901760
    %1035 = vmatpush1.msra.mxu0 %v1034
    %1036 = vmatprep.subr.mxu0 0.0
    %v1037 = vand.u32 %v980, 4294901760
    %1038 = vmatpush1.msra.mxu0 %v1037
    %1039 = vmatprep.subr.mxu0 0.0
    %v1040 = vand.u32 %v979, 4294901760
    %1041 = vmatpush1.msra.mxu0 %v1040
    %1042 = vmatprep.subr.mxu0 0.0
    %v1043 = vand.u32 %v978, 4294901760
    %1044 = vmatpush1.msra.mxu0 %v1043
    %1045 = vmatprep.subr.mxu0 0.0
    %v1046 = vand.u32 %v977, 4294901760
    %1047 = vmatpush1.msra.mxu0 %v1046
    %1048 = vmatprep.subr.mxu0 0.0
    %1049 = vmatpush2.msra.mxu0 0.0
    %1050 = vmatprep.subr.mxu0 0.0
    %1051 = vmatpush2.msra.mxu0 0.0
    %1052 = vmatprep.subr.mxu0 0.0
    %1053 = vmatpush2.msra.mxu0 0.0
    %1054 = vmatprep.subr.mxu0 0.0
    %1055 = vmatpush2.msra.mxu0 0.0
    %1056 = vmatprep.subr.mxu0 0.0
    %1057 = vmatpush2.msra.mxu0 0.0
    %1058 = vmatprep.subr.mxu0 0.0
    %1059 = vmatpush2.msra.mxu0 0.0
    %1060 = vmatprep.subr.mxu0 0.0
    %1061 = vmatpush2.msra.mxu0 0.0
    %1062 = vmatprep.subr.mxu0 0.0
    %1063 = vmatpush2.msra.mxu0 0.0
    %1064 = vmatprep.subr.mxu0 0.0
    %1065 = vmatpush2.msra.mxu0 0.0
    %1066 = vmatprep.subr.mxu0 0.0
    %1067 = vmatpush2.msra.mxu0 0.0
    %1068 = vmatprep.subr.mxu0 0.0
    %1069 = vmatpush2.msra.mxu0 0.0
    %1070 = vmatprep.subr.mxu0 0.0
    %1071 = vmatpush2.msra.mxu0 0.0
    %1072 = vmatprep.subr.mxu0 0.0
    %1073 = vmatpush2.msra.mxu0 0.0
    %1074 = vmatprep.subr.mxu0 0.0
    %1075 = vmatpush2.msra.mxu0 0.0
    %1076 = vmatprep.subr.mxu0 0.0
    %1077 = vmatpush2.msra.mxu0 0.0
    %1078 = vmatprep.subr.mxu0 0.0
    %1079 = vmatpush2.msra.mxu0 0.0
    %1080 = vmatprep.mubr.f32.mxu0 0.0
    %v1081 = vand.u32 %v976, 4294901760
    %v1082 = vsub.f32 %v976, %v1081
    %v1083 = vand.u32 %v1082, 4294901760
    %v1084 = vsub.f32 %v1082, %v1083
    %v1085 = vand.u32 %v1084, 4294901760
    %1086 = vmatmul.mubr.f32.gmra.mxu0 %v1085
    %v1087 = vpop.f32.mrf.mxu0
    %v1088 = vadd.f32 %v998, %v1087
    %v1089 = vpop.f32.mrf.mxu0
    %1090 = vdwg.mxu0
    %1091 = vmatprep.subr.mxu0 0.0
    %v1092 = vand.u32 %v992, 4294901760
    %v1093 = vsub.f32 %v992, %v1092
    %v1094 = vand.u32 %v1093, 4294901760
    %v1095 = vsub.f32 %v1093, %v1094
    %v1096 = vand.u32 %v1095, 4294901760
    %1097 = vmatpush1.msra.mxu0 %v1096
    %1098 = vmatprep.subr.mxu0 0.0
    %v1099 = vand.u32 %v991, 4294901760
    %v1100 = vsub.f32 %v991, %v1099
    %v1101 = vand.u32 %v1100, 4294901760
    %v1102 = vsub.f32 %v1100, %v1101
    %v1103 = vand.u32 %v1102, 4294901760
    %1104 = vmatpush1.msra.mxu0 %v1103
    %1105 = vmatprep.subr.mxu0 0.0
    %v1106 = vand.u32 %v990, 4294901760
    %v1107 = vsub.f32 %v990, %v1106
    %v1108 = vand.u32 %v1107, 4294901760
    %v1109 = vsub.f32 %v1107, %v1108
    %v1110 = vand.u32 %v1109, 4294901760
    %1111 = vmatpush1.msra.mxu0 %v1110
    %1112 = vmatprep.subr.mxu0 0.0
    %v1113 = vand.u32 %v989, 4294901760
    %v1114 = vsub.f32 %v989, %v1113
    %v1115 = vand.u32 %v1114, 4294901760
    %v1116 = vsub.f32 %v1114, %v1115
    %v1117 = vand.u32 %v1116, 4294901760
    %1118 = vmatpush1.msra.mxu0 %v1117
    %1119 = vmatprep.subr.mxu0 0.0
    %v1120 = vand.u32 %v988, 4294901760
    %v1121 = vsub.f32 %v988, %v1120
    %v1122 = vand.u32 %v1121, 4294901760
    %v1123 = vsub.f32 %v1121, %v1122
    %v1124 = vand.u32 %v1123, 4294901760
    %1125 = vmatpush1.msra.mxu0 %v1124
    %1126 = vmatprep.subr.mxu0 0.0
    %v1127 = vand.u32 %v987, 4294901760
    %v1128 = vsub.f32 %v987, %v1127
    %v1129 = vand.u32 %v1128, 4294901760
    %v1130 = vsub.f32 %v1128, %v1129
    %v1131 = vand.u32 %v1130, 4294901760
    %1132 = vmatpush1.msra.mxu0 %v1131
    %1133 = vmatprep.subr.mxu0 0.0
    %v1134 = vand.u32 %v986, 4294901760
    %v1135 = vsub.f32 %v986, %v1134
    %v1136 = vand.u32 %v1135, 4294901760
    %v1137 = vsub.f32 %v1135, %v1136
    %v1138 = vand.u32 %v1137, 4294901760
    %1139 = vmatpush1.msra.mxu0 %v1138
    %1140 = vmatprep.subr.mxu0 0.0
    %v1141 = vand.u32 %v985, 4294901760
    %v1142 = vsub.f32 %v985, %v1141
    %v1143 = vand.u32 %v1142, 4294901760
    %v1144 = vsub.f32 %v1142, %v1143
    %v1145 = vand.u32 %v1144, 4294901760
    %1146 = vmatpush1.msra.mxu0 %v1145
    %1147 = vmatprep.subr.mxu0 0.0
    %v1148 = vand.u32 %v984, 4294901760
    %v1149 = vsub.f32 %v984, %v1148
    %v1150 = vand.u32 %v1149, 4294901760
    %v1151 = vsub.f32 %v1149, %v1150
    %v1152 = vand.u32 %v1151, 4294901760
    %1153 = vmatpush1.msra.mxu0 %v1152
    %1154 = vmatprep.subr.mxu0 0.0
    %v1155 = vand.u32 %v983, 4294901760
    %v1156 = vsub.f32 %v983, %v1155
    %v1157 = vand.u32 %v1156, 4294901760
    %v1158 = vsub.f32 %v1156, %v1157
    %v1159 = vand.u32 %v1158, 4294901760
    %1160 = vmatpush1.msra.mxu0 %v1159
    %1161 = vmatprep.subr.mxu0 0.0
    %v1162 = vand.u32 %v982, 4294901760
    %v1163 = vsub.f32 %v982, %v1162
    %v1164 = vand.u32 %v1163, 4294901760
    %v1165 = vsub.f32 %v1163, %v1164
    %v1166 = vand.u32 %v1165, 4294901760
    %1167 = vmatpush1.msra.mxu0 %v1166
    %1168 = vmatprep.subr.mxu0 0.0
    %v1169 = vand.u32 %v981, 4294901760
    %v1170 = vsub.f32 %v981, %v1169
    %v1171 = vand.u32 %v1170, 4294901760
    %v1172 = vsub.f32 %v1170, %v1171
    %v1173 = vand.u32 %v1172, 4294901760
    %1174 = vmatpush1.msra.mxu0 %v1173
    %1175 = vmatprep.subr.mxu0 0.0
    %v1176 = vand.u32 %v980, 4294901760
    %v1177 = vsub.f32 %v980, %v1176
    %v1178 = vand.u32 %v1177, 4294901760
    %v1179 = vsub.f32 %v1177, %v1178
    %v1180 = vand.u32 %v1179, 4294901760
    %1181 = vmatpush1.msra.mxu0 %v1180
    %1182 = vmatprep.subr.mxu0 0.0
    %v1183 = vand.u32 %v979, 4294901760
    %v1184 = vsub.f32 %v979, %v1183
    %v1185 = vand.u32 %v1184, 4294901760
    %v1186 = vsub.f32 %v1184, %v1185
    %v1187 = vand.u32 %v1186, 4294901760
    %1188 = vmatpush1.msra.mxu0 %v1187
    %1189 = vmatprep.subr.mxu0 0.0
    %v1190 = vand.u32 %v978, 4294901760
    %v1191 = vsub.f32 %v978, %v1190
    %v1192 = vand.u32 %v1191, 4294901760
    %v1193 = vsub.f32 %v1191, %v1192
    %v1194 = vand.u32 %v1193, 4294901760
    %1195 = vmatpush1.msra.mxu0 %v1194
    %1196 = vmatprep.subr.mxu0 0.0
    %v1197 = vand.u32 %v977, 4294901760
    %v1198 = vsub.f32 %v977, %v1197
    %v1199 = vand.u32 %v1198, 4294901760
    %v1200 = vsub.f32 %v1198, %v1199
    %v1201 = vand.u32 %v1200, 4294901760
    %1202 = vmatpush1.msra.mxu0 %v1201
    %1203 = vmatprep.subr.mxu0 0.0
    %1204 = vmatpush2.msra.mxu0 0.0
    %1205 = vmatprep.subr.mxu0 0.0
    %1206 = vmatpush2.msra.mxu0 0.0
    %1207 = vmatprep.subr.mxu0 0.0
    %1208 = vmatpush2.msra.mxu0 0.0
    %1209 = vmatprep.subr.mxu0 0.0
    %1210 = vmatpush2.msra.mxu0 0.0
    %1211 = vmatprep.subr.mxu0 0.0
    %1212 = vmatpush2.msra.mxu0 0.0
    %1213 = vmatprep.subr.mxu0 0.0
    %1214 = vmatpush2.msra.mxu0 0.0
    %1215 = vmatprep.subr.mxu0 0.0
    %1216 = vmatpush2.msra.mxu0 0.0
    %1217 = vmatprep.subr.mxu0 0.0
    %1218 = vmatpush2.msra.mxu0 0.0
    %1219 = vmatprep.subr.mxu0 0.0
    %1220 = vmatpush2.msra.mxu0 0.0
    %1221 = vmatprep.subr.mxu0 0.0
    %1222 = vmatpush2.msra.mxu0 0.0
    %1223 = vmatprep.subr.mxu0 0.0
    %1224 = vmatpush2.msra.mxu0 0.0
    %1225 = vmatprep.subr.mxu0 0.0
    %1226 = vmatpush2.msra.mxu0 0.0
    %1227 = vmatprep.subr.mxu0 0.0
    %1228 = vmatpush2.msra.mxu0 0.0
    %1229 = vmatprep.subr.mxu0 0.0
    %1230 = vmatpush2.msra.mxu0 0.0
    %1231 = vmatprep.subr.mxu0 0.0
    %1232 = vmatpush2.msra.mxu0 0.0
    %1233 = vmatprep.subr.mxu0 0.0
    %1234 = vmatpush2.msra.mxu0 0.0
    %1235 = vmatprep.mubr.f32.mxu0 0.0
    %v1236 = vand.u32 %v976, 4294901760
    %1237 = vmatmul.mubr.f32.gmra.mxu0 %v1236
    %v1238 = vpop.f32.mrf.mxu0
    %v1239 = vadd.f32 %v1088, %v1238
    %v1240 = vpop.f32.mrf.mxu0
    %1241 = vdwg.mxu0
    %1242 = vmatprep.subr.mxu0 0.0
    %v1243 = vand.u32 %v992, 4294901760
    %v1244 = vsub.f32 %v992, %v1243
    %1245 = vmatpush1.msra.mxu0 %v1244
    %1246 = vmatprep.subr.mxu0 0.0
    %v1247 = vand.u32 %v991, 4294901760
    %v1248 = vsub.f32 %v991, %v1247
    %1249 = vmatpush1.msra.mxu0 %v1248
    %1250 = vmatprep.subr.mxu0 0.0
    %v1251 = vand.u32 %v990, 4294901760
    %v1252 = vsub.f32 %v990, %v1251
    %1253 = vmatpush1.msra.mxu0 %v1252
    %1254 = vmatprep.subr.mxu0 0.0
    %v1255 = vand.u32 %v989, 4294901760
    %v1256 = vsub.f32 %v989, %v1255
    %1257 = vmatpush1.msra.mxu0 %v1256
    %1258 = vmatprep.subr.mxu0 0.0
    %v1259 = vand.u32 %v988, 4294901760
    %v1260 = vsub.f32 %v988, %v1259
    %1261 = vmatpush1.msra.mxu0 %v1260
    %1262 = vmatprep.subr.mxu0 0.0
    %v1263 = vand.u32 %v987, 4294901760
    %v1264 = vsub.f32 %v987, %v1263
    %1265 = vmatpush1.msra.mxu0 %v1264
    %1266 = vmatprep.subr.mxu0 0.0
    %v1267 = vand.u32 %v986, 4294901760
    %v1268 = vsub.f32 %v986, %v1267
    %1269 = vmatpush1.msra.mxu0 %v1268
    %1270 = vmatprep.subr.mxu0 0.0
    %v1271 = vand.u32 %v985, 4294901760
    %v1272 = vsub.f32 %v985, %v1271
    %1273 = vmatpush1.msra.mxu0 %v1272
    %1274 = vmatprep.subr.mxu0 0.0
    %v1275 = vand.u32 %v984, 4294901760
    %v1276 = vsub.f32 %v984, %v1275
    %1277 = vmatpush1.msra.mxu0 %v1276
    %1278 = vmatprep.subr.mxu0 0.0
    %v1279 = vand.u32 %v983, 4294901760
    %v1280 = vsub.f32 %v983, %v1279
    %1281 = vmatpush1.msra.mxu0 %v1280
    %1282 = vmatprep.subr.mxu0 0.0
    %v1283 = vand.u32 %v982, 4294901760
    %v1284 = vsub.f32 %v982, %v1283
    %1285 = vmatpush1.msra.mxu0 %v1284
    %1286 = vmatprep.subr.mxu0 0.0
    %v1287 = vand.u32 %v981, 4294901760
    %v1288 = vsub.f32 %v981, %v1287
    %1289 = vmatpush1.msra.mxu0 %v1288
    %1290 = vmatprep.subr.mxu0 0.0
    %v1291 = vand.u32 %v980, 4294901760
    %v1292 = vsub.f32 %v980, %v1291
    %1293 = vmatpush1.msra.mxu0 %v1292
    %1294 = vmatprep.subr.mxu0 0.0
    %v1295 = vand.u32 %v979, 4294901760
    %v1296 = vsub.f32 %v979, %v1295
    %1297 = vmatpush1.msra.mxu0 %v1296
    %1298 = vmatprep.subr.mxu0 0.0
    %v1299 = vand.u32 %v978, 4294901760
    %v1300 = vsub.f32 %v978, %v1299
    %1301 = vmatpush1.msra.mxu0 %v1300
    %1302 = vmatprep.subr.mxu0 0.0
    %v1303 = vand.u32 %v977, 4294901760
    %v1304 = vsub.f32 %v977, %v1303
    %1305 = vmatpush1.msra.mxu0 %v1304
    %1306 = vmatprep.subr.mxu0 0.0
    %1307 = vmatpush2.msra.mxu0 0.0
    %1308 = vmatprep.subr.mxu0 0.0
    %1309 = vmatpush2.msra.mxu0 0.0
    %1310 = vmatprep.subr.mxu0 0.0
    %1311 = vmatpush2.msra.mxu0 0.0
    %1312 = vmatprep.subr.mxu0 0.0
    %1313 = vmatpush2.msra.mxu0 0.0
    %1314 = vmatprep.subr.mxu0 0.0
    %1315 = vmatpush2.msra.mxu0 0.0
    %1316 = vmatprep.subr.mxu0 0.0
    %1317 = vmatpush2.msra.mxu0 0.0
    %1318 = vmatprep.subr.mxu0 0.0
    %1319 = vmatpush2.msra.mxu0 0.0
    %1320 = vmatprep.subr.mxu0 0.0
    %1321 = vmatpush2.msra.mxu0 0.0
    %1322 = vmatprep.subr.mxu0 0.0
    %1323 = vmatpush2.msra.mxu0 0.0
    %1324 = vmatprep.subr.mxu0 0.0
    %1325 = vmatpush2.msra.mxu0 0.0
    %1326 = vmatprep.subr.mxu0 0.0
    %1327 = vmatpush2.msra.mxu0 0.0
    %1328 = vmatprep.subr.mxu0 0.0
    %1329 = vmatpush2.msra.mxu0 0.0
    %1330 = vmatprep.subr.mxu0 0.0
    %1331 = vmatpush2.msra.mxu0 0.0
    %1332 = vmatprep.subr.mxu0 0.0
    %1333 = vmatpush2.msra.mxu0 0.0
    %1334 = vmatprep.subr.mxu0 0.0
    %1335 = vmatpush2.msra.mxu0 0.0
    %1336 = vmatprep.subr.mxu0 0.0
    %1337 = vmatpush2.msra.mxu0 0.0
    %1338 = vmatprep.mubr.f32.mxu0 0.0
    %v1339 = vand.u32 %v976, 4294901760
    %v1340 = vsub.f32 %v976, %v1339
    %1341 = vmatmul.mubr.f32.gmra.mxu0 %v1340
    %v1342 = vpop.f32.mrf.mxu0
    %v1343 = vadd.f32 %v1239, %v1342
    %v1344 = vpop.f32.mrf.mxu0
    %1345 = vdwg.mxu0
    %1346 = vmatprep.subr.mxu0 0.0
    %v1347 = vand.u32 %v992, 4294901760
    %1348 = vmatpush1.msra.mxu0 %v1347
    %1349 = vmatprep.subr.mxu0 0.0
    %v1350 = vand.u32 %v991, 4294901760
    %1351 = vmatpush1.msra.mxu0 %v1350
    %1352 = vmatprep.subr.mxu0 0.0
    %v1353 = vand.u32 %v990, 4294901760
    %1354 = vmatpush1.msra.mxu0 %v1353
    %1355 = vmatprep.subr.mxu0 0.0
    %v1356 = vand.u32 %v989, 4294901760
    %1357 = vmatpush1.msra.mxu0 %v1356
    %1358 = vmatprep.subr.mxu0 0.0
    %v1359 = vand.u32 %v988, 4294901760
    %1360 = vmatpush1.msra.mxu0 %v1359
    %1361 = vmatprep.subr.mxu0 0.0
    %v1362 = vand.u32 %v987, 4294901760
    %1363 = vmatpush1.msra.mxu0 %v1362
    %1364 = vmatprep.subr.mxu0 0.0
    %v1365 = vand.u32 %v986, 4294901760
    %1366 = vmatpush1.msra.mxu0 %v1365
    %1367 = vmatprep.subr.mxu0 0.0
    %v1368 = vand.u32 %v985, 4294901760
    %1369 = vmatpush1.msra.mxu0 %v1368
    %1370 = vmatprep.subr.mxu0 0.0
    %v1371 = vand.u32 %v984, 4294901760
    %1372 = vmatpush1.msra.mxu0 %v1371
    %1373 = vmatprep.subr.mxu0 0.0
    %v1374 = vand.u32 %v983, 4294901760
    %1375 = vmatpush1.msra.mxu0 %v1374
    %1376 = vmatprep.subr.mxu0 0.0
    %v1377 = vand.u32 %v982, 4294901760
    %1378 = vmatpush1.msra.mxu0 %v1377
    %1379 = vmatprep.subr.mxu0 0.0
    %v1380 = vand.u32 %v981, 4294901760
    %1381 = vmatpush1.msra.mxu0 %v1380
    %1382 = vmatprep.subr.mxu0 0.0
    %v1383 = vand.u32 %v980, 4294901760
    %1384 = vmatpush1.msra.mxu0 %v1383
    %1385 = vmatprep.subr.mxu0 0.0
    %v1386 = vand.u32 %v979, 4294901760
    %1387 = vmatpush1.msra.mxu0 %v1386
    %1388 = vmatprep.subr.mxu0 0.0
    %v1389 = vand.u32 %v978, 4294901760
    %1390 = vmatpush1.msra.mxu0 %v1389
    %1391 = vmatprep.subr.mxu0 0.0
    %v1392 = vand.u32 %v977, 4294901760
    %1393 = vmatpush1.msra.mxu0 %v1392
    %1394 = vmatprep.subr.mxu0 0.0
    %1395 = vmatpush2.msra.mxu0 0.0
    %1396 = vmatprep.subr.mxu0 0.0
    %1397 = vmatpush2.msra.mxu0 0.0
    %1398 = vmatprep.subr.mxu0 0.0
    %1399 = vmatpush2.msra.mxu0 0.0
    %1400 = vmatprep.subr.mxu0 0.0
    %1401 = vmatpush2.msra.mxu0 0.0
    %1402 = vmatprep.subr.mxu0 0.0
    %1403 = vmatpush2.msra.mxu0 0.0
    %1404 = vmatprep.subr.mxu0 0.0
    %1405 = vmatpush2.msra.mxu0 0.0
    %1406 = vmatprep.subr.mxu0 0.0
    %1407 = vmatpush2.msra.mxu0 0.0
    %1408 = vmatprep.subr.mxu0 0.0
    %1409 = vmatpush2.msra.mxu0 0.0
    %1410 = vmatprep.subr.mxu0 0.0
    %1411 = vmatpush2.msra.mxu0 0.0
    %1412 = vmatprep.subr.mxu0 0.0
    %1413 = vmatpush2.msra.mxu0 0.0
    %1414 = vmatprep.subr.mxu0 0.0
    %1415 = vmatpush2.msra.mxu0 0.0
    %1416 = vmatprep.subr.mxu0 0.0
    %1417 = vmatpush2.msra.mxu0 0.0
    %1418 = vmatprep.subr.mxu0 0.0
    %1419 = vmatpush2.msra.mxu0 0.0
    %1420 = vmatprep.subr.mxu0 0.0
    %1421 = vmatpush2.msra.mxu0 0.0
    %1422 = vmatprep.subr.mxu0 0.0
    %1423 = vmatpush2.msra.mxu0 0.0
    %1424 = vmatprep.subr.mxu0 0.0
    %1425 = vmatpush2.msra.mxu0 0.0
    %1426 = vmatprep.mubr.f32.mxu0 0.0
    %v1427 = vand.u32 %v976, 4294901760
    %v1428 = vsub.f32 %v976, %v1427
    %v1429 = vand.u32 %v1428, 4294901760
    %1430 = vmatmul.mubr.f32.gmra.mxu0 %v1429
    %v1431 = vpop.f32.mrf.mxu0
    %v1432 = vadd.f32 %v1343, %v1431
    %v1433 = vpop.f32.mrf.mxu0
    %1434 = vdwg.mxu0
    %1435 = vmatprep.subr.mxu0 0.0
    %v1436 = vand.u32 %v992, 4294901760
    %v1437 = vsub.f32 %v992, %v1436
    %v1438 = vand.u32 %v1437, 4294901760
    %1439 = vmatpush1.msra.mxu0 %v1438
    %1440 = vmatprep.subr.mxu0 0.0
    %v1441 = vand.u32 %v991, 4294901760
    %v1442 = vsub.f32 %v991, %v1441
    %v1443 = vand.u32 %v1442, 4294901760
    %1444 = vmatpush1.msra.mxu0 %v1443
    %1445 = vmatprep.subr.mxu0 0.0
    %v1446 = vand.u32 %v990, 4294901760
    %v1447 = vsub.f32 %v990, %v1446
    %v1448 = vand.u32 %v1447, 4294901760
    %1449 = vmatpush1.msra.mxu0 %v1448
    %1450 = vmatprep.subr.mxu0 0.0
    %v1451 = vand.u32 %v989, 4294901760
    %v1452 = vsub.f32 %v989, %v1451
    %v1453 = vand.u32 %v1452, 4294901760
    %1454 = vmatpush1.msra.mxu0 %v1453
    %1455 = vmatprep.subr.mxu0 0.0
    %v1456 = vand.u32 %v988, 4294901760
    %v1457 = vsub.f32 %v988, %v1456
    %v1458 = vand.u32 %v1457, 4294901760
    %1459 = vmatpush1.msra.mxu0 %v1458
    %1460 = vmatprep.subr.mxu0 0.0
    %v1461 = vand.u32 %v987, 4294901760
    %v1462 = vsub.f32 %v987, %v1461
    %v1463 = vand.u32 %v1462, 4294901760
    %1464 = vmatpush1.msra.mxu0 %v1463
    %1465 = vmatprep.subr.mxu0 0.0
    %v1466 = vand.u32 %v986, 4294901760
    %v1467 = vsub.f32 %v986, %v1466
    %v1468 = vand.u32 %v1467, 4294901760
    %1469 = vmatpush1.msra.mxu0 %v1468
    %1470 = vmatprep.subr.mxu0 0.0
    %v1471 = vand.u32 %v985, 4294901760
    %v1472 = vsub.f32 %v985, %v1471
    %v1473 = vand.u32 %v1472, 4294901760
    %1474 = vmatpush1.msra.mxu0 %v1473
    %1475 = vmatprep.subr.mxu0 0.0
    %v1476 = vand.u32 %v984, 4294901760
    %v1477 = vsub.f32 %v984, %v1476
    %v1478 = vand.u32 %v1477, 4294901760
    %1479 = vmatpush1.msra.mxu0 %v1478
    %1480 = vmatprep.subr.mxu0 0.0
    %v1481 = vand.u32 %v983, 4294901760
    %v1482 = vsub.f32 %v983, %v1481
    %v1483 = vand.u32 %v1482, 4294901760
    %1484 = vmatpush1.msra.mxu0 %v1483
    %1485 = vmatprep.subr.mxu0 0.0
    %v1486 = vand.u32 %v982, 4294901760
    %v1487 = vsub.f32 %v982, %v1486
    %v1488 = vand.u32 %v1487, 4294901760
    %1489 = vmatpush1.msra.mxu0 %v1488
    %1490 = vmatprep.subr.mxu0 0.0
    %v1491 = vand.u32 %v981, 4294901760
    %v1492 = vsub.f32 %v981, %v1491
    %v1493 = vand.u32 %v1492, 4294901760
    %1494 = vmatpush1.msra.mxu0 %v1493
    %1495 = vmatprep.subr.mxu0 0.0
    %v1496 = vand.u32 %v980, 4294901760
    %v1497 = vsub.f32 %v980, %v1496
    %v1498 = vand.u32 %v1497, 4294901760
    %1499 = vmatpush1.msra.mxu0 %v1498
    %1500 = vmatprep.subr.mxu0 0.0
    %v1501 = vand.u32 %v979, 4294901760
    %v1502 = vsub.f32 %v979, %v1501
    %v1503 = vand.u32 %v1502, 4294901760
    %1504 = vmatpush1.msra.mxu0 %v1503
    %1505 = vmatprep.subr.mxu0 0.0
    %v1506 = vand.u32 %v978, 4294901760
    %v1507 = vsub.f32 %v978, %v1506
    %v1508 = vand.u32 %v1507, 4294901760
    %1509 = vmatpush1.msra.mxu0 %v1508
    %1510 = vmatprep.subr.mxu0 0.0
    %v1511 = vand.u32 %v977, 4294901760
    %v1512 = vsub.f32 %v977, %v1511
    %v1513 = vand.u32 %v1512, 4294901760
    %1514 = vmatpush1.msra.mxu0 %v1513
    %1515 = vmatprep.subr.mxu0 0.0
    %1516 = vmatpush2.msra.mxu0 0.0
    %1517 = vmatprep.subr.mxu0 0.0
    %1518 = vmatpush2.msra.mxu0 0.0
    %1519 = vmatprep.subr.mxu0 0.0
    %1520 = vmatpush2.msra.mxu0 0.0
    %1521 = vmatprep.subr.mxu0 0.0
    %1522 = vmatpush2.msra.mxu0 0.0
    %1523 = vmatprep.subr.mxu0 0.0
    %1524 = vmatpush2.msra.mxu0 0.0
    %1525 = vmatprep.subr.mxu0 0.0
    %1526 = vmatpush2.msra.mxu0 0.0
    %1527 = vmatprep.subr.mxu0 0.0
    %1528 = vmatpush2.msra.mxu0 0.0
    %1529 = vmatprep.subr.mxu0 0.0
    %1530 = vmatpush2.msra.mxu0 0.0
    %1531 = vmatprep.subr.mxu0 0.0
    %1532 = vmatpush2.msra.mxu0 0.0
    %1533 = vmatprep.subr.mxu0 0.0
    %1534 = vmatpush2.msra.mxu0 0.0
    %1535 = vmatprep.subr.mxu0 0.0
    %1536 = vmatpush2.msra.mxu0 0.0
    %1537 = vmatprep.subr.mxu0 0.0
    %1538 = vmatpush2.msra.mxu0 0.0
    %1539 = vmatprep.subr.mxu0 0.0
    %1540 = vmatpush2.msra.mxu0 0.0
    %1541 = vmatprep.subr.mxu0 0.0
    %1542 = vmatpush2.msra.mxu0 0.0
    %1543 = vmatprep.subr.mxu0 0.0
    %1544 = vmatpush2.msra.mxu0 0.0
    %1545 = vmatprep.subr.mxu0 0.0
    %1546 = vmatpush2.msra.mxu0 0.0
    %1547 = vmatprep.mubr.f32.mxu0 0.0
    %v1548 = vand.u32 %v976, 4294901760
    %1549 = vmatmul.mubr.f32.gmra.mxu0 %v1548
    %v1550 = vpop.f32.mrf.mxu0
    %v1551 = vadd.f32 %v1432, %v1550
    %v1552 = vpop.f32.mrf.mxu0
    %1553 = vdwg.mxu0
    %1554 = vmatprep.subr.mxu0 0.0
    %v1555 = vand.u32 %v992, 4294901760
    %1556 = vmatpush1.msra.mxu0 %v1555
    %1557 = vmatprep.subr.mxu0 0.0
    %v1558 = vand.u32 %v991, 4294901760
    %1559 = vmatpush1.msra.mxu0 %v1558
    %1560 = vmatprep.subr.mxu0 0.0
    %v1561 = vand.u32 %v990, 4294901760
    %1562 = vmatpush1.msra.mxu0 %v1561
    %1563 = vmatprep.subr.mxu0 0.0
    %v1564 = vand.u32 %v989, 4294901760
    %1565 = vmatpush1.msra.mxu0 %v1564
    %1566 = vmatprep.subr.mxu0 0.0
    %v1567 = vand.u32 %v988, 4294901760
    %1568 = vmatpush1.msra.mxu0 %v1567
    %1569 = vmatprep.subr.mxu0 0.0
    %v1570 = vand.u32 %v987, 4294901760
    %1571 = vmatpush1.msra.mxu0 %v1570
    %1572 = vmatprep.subr.mxu0 0.0
    %v1573 = vand.u32 %v986, 4294901760
    %1574 = vmatpush1.msra.mxu0 %v1573
    %1575 = vmatprep.subr.mxu0 0.0
    %v1576 = vand.u32 %v985, 4294901760
    %1577 = vmatpush1.msra.mxu0 %v1576
    %1578 = vmatprep.subr.mxu0 0.0
    %v1579 = vand.u32 %v984, 4294901760
    %1580 = vmatpush1.msra.mxu0 %v1579
    %1581 = vmatprep.subr.mxu0 0.0
    %v1582 = vand.u32 %v983, 4294901760
    %1583 = vmatpush1.msra.mxu0 %v1582
    %1584 = vmatprep.subr.mxu0 0.0
    %v1585 = vand.u32 %v982, 4294901760
    %1586 = vmatpush1.msra.mxu0 %v1585
    %1587 = vmatprep.subr.mxu0 0.0
    %v1588 = vand.u32 %v981, 4294901760
    %1589 = vmatpush1.msra.mxu0 %v1588
    %1590 = vmatprep.subr.mxu0 0.0
    %v1591 = vand.u32 %v980, 4294901760
    %1592 = vmatpush1.msra.mxu0 %v1591
    %1593 = vmatprep.subr.mxu0 0.0
    %v1594 = vand.u32 %v979, 4294901760
    %1595 = vmatpush1.msra.mxu0 %v1594
    %1596 = vmatprep.subr.mxu0 0.0
    %v1597 = vand.u32 %v978, 4294901760
    %1598 = vmatpush1.msra.mxu0 %v1597
    %1599 = vmatprep.subr.mxu0 0.0
    %v1600 = vand.u32 %v977, 4294901760
    %1601 = vmatpush1.msra.mxu0 %v1600
    %1602 = vmatprep.subr.mxu0 0.0
    %1603 = vmatpush2.msra.mxu0 0.0
    %1604 = vmatprep.subr.mxu0 0.0
    %1605 = vmatpush2.msra.mxu0 0.0
    %1606 = vmatprep.subr.mxu0 0.0
    %1607 = vmatpush2.msra.mxu0 0.0
    %1608 = vmatprep.subr.mxu0 0.0
    %1609 = vmatpush2.msra.mxu0 0.0
    %1610 = vmatprep.subr.mxu0 0.0
    %1611 = vmatpush2.msra.mxu0 0.0
    %1612 = vmatprep.subr.mxu0 0.0
    %1613 = vmatpush2.msra.mxu0 0.0
    %1614 = vmatprep.subr.mxu0 0.0
    %1615 = vmatpush2.msra.mxu0 0.0
    %1616 = vmatprep.subr.mxu0 0.0
    %1617 = vmatpush2.msra.mxu0 0.0
    %1618 = vmatprep.subr.mxu0 0.0
    %1619 = vmatpush2.msra.mxu0 0.0
    %1620 = vmatprep.subr.mxu0 0.0
    %1621 = vmatpush2.msra.mxu0 0.0
    %1622 = vmatprep.subr.mxu0 0.0
    %1623 = vmatpush2.msra.mxu0 0.0
    %1624 = vmatprep.subr.mxu0 0.0
    %1625 = vmatpush2.msra.mxu0 0.0
    %1626 = vmatprep.subr.mxu0 0.0
    %1627 = vmatpush2.msra.mxu0 0.0
    %1628 = vmatprep.subr.mxu0 0.0
    %1629 = vmatpush2.msra.mxu0 0.0
    %1630 = vmatprep.subr.mxu0 0.0
    %1631 = vmatpush2.msra.mxu0 0.0
    %1632 = vmatprep.subr.mxu0 0.0
    %1633 = vmatpush2.msra.mxu0 0.0
    %1634 = vmatprep.mubr.f32.mxu0 0.0
    %v1635 = vand.u32 %v976, 4294901760
    %1636 = vmatmul.mubr.f32.gmra.mxu0 %v1635
    %v1637 = vpop.f32.mrf.mxu0
    %v1638 = vadd.f32 %v1551, %v1637
    %v1639 = vpop.f32.mrf.mxu0
    %1640 = vdwg.mxu0
    %1641 = vst [vmem:[#allocation8] sm:$0xff] %v1638
    // Predicated region
    $region34: #{tpu_custom_call.1} parent=1 // pred_check
      _
    $region35: #{tpu_custom_call.1} parent=1 // pred_check_branch
      %1643 = sbr.rel (0) target = $region37
    $region36: #{tpu_custom_call.1} parent=1 // pred_region
      %s1645 = ssub.s32 128, 128
      %1646 = vsyncadd [#allocation4], %s1645
      %s1648 = sshll.u32 [#allocation8], 4
      %s1649 = int_to_ptr.vmem [resolvable:$true] %s1648
      %1651 = dma.vmem_to_hbm [thread:$0]  %s1649, 128, %s5, [#allocation4]
    $region37: #{tpu_custom_call.1} parent=1 // pred_fallthru
      _
    // Predicated region
    $region38: #{tpu_custom_call.1} parent=1 // pred_check
      _
    $region39: #{tpu_custom_call.1} parent=1 // pred_check_branch
      %1653 = sbr.rel (0) target = $region41
    $region40: #{tpu_custom_call.1} parent=1 // pred_region
      %1654 = dma.done [#allocation4], 128
    $region41: #{tpu_custom_call.1} parent=1 // pred_fallthru
      _
    %1655 = vsyncpa [#allocation3], 1
    %1656 = vsyncpa [#allocation6], 1
    %1657 = vsyncpa [#allocation4], 1

</llo_original>
